<compile_context>
chip_gen: v6e
topology: v6e:2x2x1
jax: 0.10.0
libtpu: 0.0.40
codegen_flags: <defaults>
</compile_context>

<pallas_src>
import functools

import jax
import jax.numpy as jnp
from jax import lax
from jax.experimental import pallas as pl
from jax.experimental.pallas import tpu as pltpu  # noqa: F401  (not required at this size)

# ----------------------------- configuration --------------------------------
B = 2          # batch
C = 8          # channels
H = 16         # height
W = 16         # width
L = H * W      # flattened spatial dim
NITER = 2      # proximal-gradient iterations (torch ctor arg `niter`)
_EPS = 1e-20   # guard for the alpha / mu line-search denominators


# ------------------------------ fused kernel ---------------------------------


def _npg_fused_kernel(d_ref, w_ref, b_ref, x_ref, xref_ref, *,
                      batch, spatial, niter):
    """Whole neuralProximalGradient.forward, VMEM resident.

    d_ref          : [C, B*L]  data D (channel-major, batch folded into lanes)
    w_ref          : [7, C, C] packed: A, A^T, AA^T, A^TA, AA^TA, W1, W2
    b_ref          : [2, C, 1] packed: b1, b2
    x_ref, xref_ref: [C, B*L]  outputs X, Xref
    """
    c = w_ref.shape[-1]
    bl = batch * spatial

    D = d_ref[...]                       # [C, B*L]

    # Hoisted weight loads (once, above the unrolled loop).
    A = w_ref[0]                         # forOp forward matrix
    At = w_ref[1]                        # forOp adjoint matrix
    AAt = w_ref[2]                       # A @ A^T        (precomputed in wrapper)
    AtA = w_ref[3]                       # A^T @ A
    AAtA = w_ref[4]                      # A @ A^T @ A
    W1 = w_ref[5]                        # regNet layer 1
    W2 = w_ref[6]                        # regNet layer 2
    # Bias lane-broadcasts hoisted out of the unrolled loop.
    b1 = jnp.broadcast_to(b_ref[0], (c, bl))
    b2 = jnp.broadcast_to(b_ref[1], (c, bl))

    lane_ids = lax.broadcasted_iota(jnp.int32, (1, bl), 1)

    def mm(Wm, Z):
        # Plain 2-D channel mix over the [C, B*L] slab: one MXU push per op.
        return jnp.dot(Wm, Z, preferred_element_type=jnp.float32)

    def per_batch_ratio(num_arr, den_arr):
        # (sum num / sum den) per batch, broadcast back to a [1, B*L] lane row.
        # (mean factors cancel in the ratio -> plain sums.)
        num_row = jnp.zeros((1, bl), jnp.float32)
        den_row = jnp.zeros((1, bl), jnp.float32)
        for bi in range(batch):
            sl = slice(bi * spatial, (bi + 1) * spatial)   # lane-aligned (256)
            n_b = jnp.sum(num_arr[:, sl], keepdims=True)   # [1, 1]
            d_b = jnp.sum(den_arr[:, sl], keepdims=True)
            seg = (lane_ids >= bi * spatial) & (lane_ids < (bi + 1) * spatial)
            num_row = jnp.where(seg, n_b, num_row)
            den_row = jnp.where(seg, d_b, den_row)
        # Divide on the EUP slot; eps guards the 0/0 -> NaN case.
        return num_row * pl.reciprocal(den_row + _EPS, approx=True)

    def reg_net(Z):
        # TODO(synk): regNet is an external module supplied to __init__;
        # synthetic stand-in = 2-layer tanh channel MLP (Zall memory unused).
        hdn = jnp.tanh(mm(W1, Z) + b1)
        return mm(W2, hdn) + b2

    # ---- prologue: adjoint + alpha line search (loop-invariant, hoisted) ----
    AtD = mm(At, D)                       # Z   = forOp.adjoint(D)
    AAtD = mm(AAt, D)                     # Az  = forOp.forward(Z) = (A A^T) D
    alpha = per_batch_ratio(D * AAtD, AAtD * AAtD)
    Z = alpha * AtD

    # ---- proximal-gradient iterations (statically unrolled, NITER small) ----
    Zref = Z
    for _ in range(niter):
        Zref = reg_net(Z)
        # All three operator matmuls depend only on Zref -> issue back-to-back.
        AZref = mm(A, Zref)
        AtAZref = mm(AtA, Zref)
        AAtAZref = mm(AAtA, Zref)
        R = D - AZref                     # D - forOp.forward(Zref)
        G = AtD - AtAZref                 # forOp.adjoint(R)
        Ag = AAtD - AAtAZref              # forOp.forward(G)
        mu = per_batch_ratio(R * Ag, Ag * Ag)
        Z = Zref + mu * G

    x_ref[...] = Z
    xref_ref[...] = Zref


# ------------------------------ forward wrapper -------------------------------


@jax.jit
def neural_proximal_gradient_forward(params, D):
    """JAX equivalent of neuralProximalGradient.forward(D)."""
    b, c, h, w = D.shape
    l = h * w
    # Layout plumbing only: [B,C,H,W] -> [C, B*L] (lane-dense minor dim = 512).
    Dflat = jnp.transpose(D.reshape(b, c, l).astype(jnp.float32),
                          (1, 0, 2)).reshape(c, b * l)

    A = params["forop_A"].astype(jnp.float32)
    At = A.T
    # Precomputed A-derived products: removes two serial matmuls per iteration
    # from the in-kernel MXU dependency chain.
    w_stack = jnp.stack([A, At, A @ At, At @ A, A @ At @ A,
                         params["reg_w1"].astype(jnp.float32),
                         params["reg_w2"].astype(jnp.float32)])
    b_stack = jnp.stack([params["reg_b1"].reshape(c, 1),
                         params["reg_b2"].reshape(c, 1)]).astype(jnp.float32)

    kernel = functools.partial(_npg_fused_kernel,
                               batch=b, spatial=l, niter=NITER)
    Xf, Xreff = pl.pallas_call(
        kernel,
        out_shape=(jax.ShapeDtypeStruct((c, b * l), jnp.float32),
                   jax.ShapeDtypeStruct((c, b * l), jnp.float32)),
    )(Dflat, w_stack, b_stack)

    def unflat(Y):
        return jnp.transpose(Y.reshape(c, b, l), (1, 0, 2)).reshape(b, c, h, w)

    # torch returns (X, Xref, torch.Tensor([0]))
    return unflat(Xf), unflat(Xreff), jnp.zeros((1,), jnp.float32)


# ------------------------- pure-JAX reference (check) -------------------------


def _reference_forward(params, D):
    """Un-fused reference with the original (non-hoisted) math."""
    b, c, h, w = D.shape
    Dc = D.reshape(b, c, h * w).astype(jnp.float32)
    A = params["forop_A"]
    W1, W2 = params["reg_w1"], params["reg_w2"]
    b1 = params["reg_b1"].reshape(1, c, 1)
    b2 = params["reg_b2"].reshape(1, c, 1)

    fwd = lambda Z: jnp.einsum("ij,bjl->bil", A, Z)
    adj = lambda Rr: jnp.einsum("ij,bjl->bil", A.T, Rr)
    bmean = lambda X: jnp.mean(X, axis=(1, 2), keepdims=True)

    Z = adj(Dc)
    Az = fwd(Z)
    alpha = bmean(Dc * Az) / bmean(Az * Az)
    Z = alpha * Z
    Zref = Z
    for _ in range(NITER):
        hdn = jnp.tanh(jnp.einsum("ij,bjl->bil", W1, Z) + b1)
        Zref = jnp.einsum("ij,bjl->bil", W2, hdn) + b2
        R = Dc - fwd(Zref)
        G = adj(R)
        Ag = fwd(G)
        mu = bmean(R * Ag) / bmean(Ag * Ag)
        Z = Zref + mu * G
    return Z.reshape(b, c, h, w), Zref.reshape(b, c, h, w)


# ------------------------------ parameter init --------------------------------


def init_params(key):
    ka, k1, k2 = jax.random.split(key, 3)

    def xavier(k, shape):
        lim = (6.0 / (shape[0] + shape[1])) ** 0.5
        return jax.random.uniform(k, shape, jnp.float32, -lim, lim)

    return {
        # TODO(synk): forOp stand-in (well-conditioned so alpha/mu are finite)
        "forop_A": jnp.eye(C, dtype=jnp.float32) + 0.1 * xavier(ka, (C, C)),
        # TODO(synk): regNet stand-in weights
        "reg_w1": xavier(k1, (C, C)),
        "reg_b1": jnp.zeros((C,), jnp.float32),
        "reg_w2": xavier(k2, (C, C)),
        "reg_b2": jnp.zeros((C,), jnp.float32),
    }


# ----------------------------------- main --------------------------------------

if __name__ == "__main__":
    key = jax.random.PRNGKey(0)
    kp, kd = jax.random.split(key)
    params = init_params(kp)

    D = jax.random.normal(kd, (B, C, H, W), jnp.float32)

    X, Xref, R0 = neural_proximal_gradient_forward(params, D)
    jax.block_until_ready((X, Xref, R0))

    assert X.shape == (B, C, H, W) and Xref.shape == (B, C, H, W)
    assert bool(jnp.all(jnp.isfinite(X))) and bool(jnp.all(jnp.isfinite(Xref)))

    # Loose-tolerance sanity check vs. the un-fused reference (the in-kernel
    # approx reciprocal introduces ~1e-3-level relative error in alpha/mu).
    Xr, Xrefr = _reference_forward(params, D)
    assert bool(jnp.allclose(X, Xr, rtol=5e-2, atol=5e-2))
    assert bool(jnp.allclose(Xref, Xrefr, rtol=5e-2, atol=5e-2))

    print("KERNEL_OK")
</pallas_src>

<mosaic_0001>
module attributes {stable_mosaic.version = 11 : i64} {
  func.func @_npg_fused_kernel(%arg0: memref<8x512xf32, #tpu.memory_space<vmem>>, %arg1: memref<7x8x8xf32, #tpu.memory_space<vmem>>, %arg2: memref<2x8x1xf32, #tpu.memory_space<vmem>>, %arg3: memref<8x512xf32, #tpu.memory_space<vmem>>, %arg4: memref<8x512xf32, #tpu.memory_space<vmem>>) attributes {dimension_semantics = [], scalar_prefetch = 0 : i64, scratch_operands = 0 : i64, tpu.core_type = #tpu.core_type<tc>} {
    %c0 = arith.constant 0 : index
    %c0_0 = arith.constant 0 : index
    %0 = vector.load %arg0[%c0, %c0_0] : memref<8x512xf32, #tpu.memory_space<vmem>>, vector<8x512xf32>
    %c0_1 = arith.constant 0 : index
    %c0_2 = arith.constant 0 : index
    %c0_3 = arith.constant 0 : index
    %1 = vector.load %arg1[%c0_1, %c0_2, %c0_3] : memref<7x8x8xf32, #tpu.memory_space<vmem>>, vector<1x8x8xf32>
    %2 = vector.shape_cast %1 : vector<1x8x8xf32> to vector<8x8xf32>
    %c1 = arith.constant 1 : index
    %c0_4 = arith.constant 0 : index
    %c0_5 = arith.constant 0 : index
    %3 = vector.load %arg1[%c1, %c0_4, %c0_5] : memref<7x8x8xf32, #tpu.memory_space<vmem>>, vector<1x8x8xf32>
    %4 = vector.shape_cast %3 : vector<1x8x8xf32> to vector<8x8xf32>
    %c2 = arith.constant 2 : index
    %c0_6 = arith.constant 0 : index
    %c0_7 = arith.constant 0 : index
    %5 = vector.load %arg1[%c2, %c0_6, %c0_7] : memref<7x8x8xf32, #tpu.memory_space<vmem>>, vector<1x8x8xf32>
    %6 = vector.shape_cast %5 : vector<1x8x8xf32> to vector<8x8xf32>
    %c3 = arith.constant 3 : index
    %c0_8 = arith.constant 0 : index
    %c0_9 = arith.constant 0 : index
    %7 = vector.load %arg1[%c3, %c0_8, %c0_9] : memref<7x8x8xf32, #tpu.memory_space<vmem>>, vector<1x8x8xf32>
    %8 = vector.shape_cast %7 : vector<1x8x8xf32> to vector<8x8xf32>
    %c4 = arith.constant 4 : index
    %c0_10 = arith.constant 0 : index
    %c0_11 = arith.constant 0 : index
    %9 = vector.load %arg1[%c4, %c0_10, %c0_11] : memref<7x8x8xf32, #tpu.memory_space<vmem>>, vector<1x8x8xf32>
    %10 = vector.shape_cast %9 : vector<1x8x8xf32> to vector<8x8xf32>
    %c5 = arith.constant 5 : index
    %c0_12 = arith.constant 0 : index
    %c0_13 = arith.constant 0 : index
    %11 = vector.load %arg1[%c5, %c0_12, %c0_13] : memref<7x8x8xf32, #tpu.memory_space<vmem>>, vector<1x8x8xf32>
    %12 = vector.shape_cast %11 : vector<1x8x8xf32> to vector<8x8xf32>
    %c6 = arith.constant 6 : index
    %c0_14 = arith.constant 0 : index
    %c0_15 = arith.constant 0 : index
    %13 = vector.load %arg1[%c6, %c0_14, %c0_15] : memref<7x8x8xf32, #tpu.memory_space<vmem>>, vector<1x8x8xf32>
    %14 = vector.shape_cast %13 : vector<1x8x8xf32> to vector<8x8xf32>
    %c0_16 = arith.constant 0 : index
    %c0_17 = arith.constant 0 : index
    %c0_18 = arith.constant 0 : index
    %15 = vector.load %arg2[%c0_16, %c0_17, %c0_18] : memref<2x8x1xf32, #tpu.memory_space<vmem>>, vector<1x8x1xf32>
    %16 = vector.shape_cast %15 : vector<1x8x1xf32> to vector<8x1xf32>
    %17 = vector.shape_cast %16 : vector<8x1xf32> to vector<8x1xf32>
    %18 = vector.broadcast %17 : vector<8x1xf32> to vector<8x512xf32>
    %c1_19 = arith.constant 1 : index
    %c0_20 = arith.constant 0 : index
    %c0_21 = arith.constant 0 : index
    %19 = vector.load %arg2[%c1_19, %c0_20, %c0_21] : memref<2x8x1xf32, #tpu.memory_space<vmem>>, vector<1x8x1xf32>
    %20 = vector.shape_cast %19 : vector<1x8x1xf32> to vector<8x1xf32>
    %21 = vector.shape_cast %20 : vector<8x1xf32> to vector<8x1xf32>
    %22 = vector.broadcast %21 : vector<8x1xf32> to vector<8x512xf32>
    %23 = tpu.iota {dimensions = array<i32: 1>} : vector<1x512xi32>
    %cst = arith.constant dense<0.000000e+00> : vector<8x512xf32>
    %24 = tpu.matmul %4, %0, %cst {dimension_numbers = #tpu.dot_dimension_numbers<[1], [0], [0], [1], [0, 0, 1, 1], [], []>} : vector<8x8xf32>, vector<8x512xf32>, vector<8x512xf32> -> vector<8x512xf32>
    %cst_22 = arith.constant dense<0.000000e+00> : vector<8x512xf32>
    %25 = tpu.matmul %6, %0, %cst_22 {dimension_numbers = #tpu.dot_dimension_numbers<[1], [0], [0], [1], [0, 0, 1, 1], [], []>} : vector<8x8xf32>, vector<8x512xf32>, vector<8x512xf32> -> vector<8x512xf32>
    %26 = arith.mulf %0, %25 : vector<8x512xf32>
    %27 = arith.mulf %25, %25 : vector<8x512xf32>
    %cst_23 = arith.constant 0.000000e+00 : f32
    %28 = vector.broadcast %cst_23 : f32 to vector<1x512xf32>
    %cst_24 = arith.constant 0.000000e+00 : f32
    %29 = vector.broadcast %cst_24 : f32 to vector<1x512xf32>
    %30 = vector.extract_strided_slice %26 {offsets = [0, 0], sizes = [8, 256], strides = [1, 1]} : vector<8x512xf32> to vector<8x256xf32>
    %31 = vector.shape_cast %30 : vector<8x256xf32> to vector<1x8x256xf32>
    %cst_25 = arith.constant dense<0.000000e+00> : vector<1xf32>
    %32 = vector.multi_reduction <add>, %31, %cst_25 [1, 2] : vector<1x8x256xf32> to vector<1xf32>
    %33 = vector.shape_cast %32 : vector<1xf32> to vector<1x1x1xf32>
    %34 = vector.extract %33[0, 0, 0] : f32 from vector<1x1x1xf32>
    %35 = vector.broadcast %34 : f32 to vector<1x1xf32>
    %36 = vector.extract_strided_slice %27 {offsets = [0, 0], sizes = [8, 256], strides = [1, 1]} : vector<8x512xf32> to vector<8x256xf32>
    %37 = vector.shape_cast %36 : vector<8x256xf32> to vector<1x8x256xf32>
    %cst_26 = arith.constant dense<0.000000e+00> : vector<1xf32>
    %38 = vector.multi_reduction <add>, %37, %cst_26 [1, 2] : vector<1x8x256xf32> to vector<1xf32>
    %39 = vector.shape_cast %38 : vector<1xf32> to vector<1x1x1xf32>
    %40 = vector.extract %39[0, 0, 0] : f32 from vector<1x1x1xf32>
    %41 = vector.broadcast %40 : f32 to vector<1x1xf32>
    %c0_i32 = arith.constant 0 : i32
    %42 = vector.broadcast %c0_i32 : i32 to vector<1x512xi32>
    %43 = arith.cmpi sge, %23, %42 : vector<1x512xi32>
    %c256_i32 = arith.constant 256 : i32
    %44 = vector.broadcast %c256_i32 : i32 to vector<1x512xi32>
    %45 = arith.cmpi slt, %23, %44 : vector<1x512xi32>
    %46 = arith.andi %43, %45 : vector<1x512xi1>
    %47 = vector.shape_cast %35 : vector<1x1xf32> to vector<1x1xf32>
    %48 = vector.broadcast %47 : vector<1x1xf32> to vector<1x512xf32>
    %49 = arith.select %46, %48, %28 : vector<1x512xi1>, vector<1x512xf32>
    %50 = vector.shape_cast %41 : vector<1x1xf32> to vector<1x1xf32>
    %51 = vector.broadcast %50 : vector<1x1xf32> to vector<1x512xf32>
    %52 = arith.select %46, %51, %29 : vector<1x512xi1>, vector<1x512xf32>
    %53 = vector.extract_strided_slice %26 {offsets = [0, 256], sizes = [8, 256], strides = [1, 1]} : vector<8x512xf32> to vector<8x256xf32>
    %54 = vector.shape_cast %53 : vector<8x256xf32> to vector<1x8x256xf32>
    %cst_27 = arith.constant dense<0.000000e+00> : vector<1xf32>
    %55 = vector.multi_reduction <add>, %54, %cst_27 [1, 2] : vector<1x8x256xf32> to vector<1xf32>
    %56 = vector.shape_cast %55 : vector<1xf32> to vector<1x1x1xf32>
    %57 = vector.extract %56[0, 0, 0] : f32 from vector<1x1x1xf32>
    %58 = vector.broadcast %57 : f32 to vector<1x1xf32>
    %59 = vector.extract_strided_slice %27 {offsets = [0, 256], sizes = [8, 256], strides = [1, 1]} : vector<8x512xf32> to vector<8x256xf32>
    %60 = vector.shape_cast %59 : vector<8x256xf32> to vector<1x8x256xf32>
    %cst_28 = arith.constant dense<0.000000e+00> : vector<1xf32>
    %61 = vector.multi_reduction <add>, %60, %cst_28 [1, 2] : vector<1x8x256xf32> to vector<1xf32>
    %62 = vector.shape_cast %61 : vector<1xf32> to vector<1x1x1xf32>
    %63 = vector.extract %62[0, 0, 0] : f32 from vector<1x1x1xf32>
    %64 = vector.broadcast %63 : f32 to vector<1x1xf32>
    %c256_i32_29 = arith.constant 256 : i32
    %65 = vector.broadcast %c256_i32_29 : i32 to vector<1x512xi32>
    %66 = arith.cmpi sge, %23, %65 : vector<1x512xi32>
    %c512_i32 = arith.constant 512 : i32
    %67 = vector.broadcast %c512_i32 : i32 to vector<1x512xi32>
    %68 = arith.cmpi slt, %23, %67 : vector<1x512xi32>
    %69 = arith.andi %66, %68 : vector<1x512xi1>
    %70 = vector.shape_cast %58 : vector<1x1xf32> to vector<1x1xf32>
    %71 = vector.broadcast %70 : vector<1x1xf32> to vector<1x512xf32>
    %72 = arith.select %69, %71, %49 : vector<1x512xi1>, vector<1x512xf32>
    %73 = vector.shape_cast %64 : vector<1x1xf32> to vector<1x1xf32>
    %74 = vector.broadcast %73 : vector<1x1xf32> to vector<1x512xf32>
    %75 = arith.select %69, %74, %52 : vector<1x512xi1>, vector<1x512xf32>
    %cst_30 = arith.constant 9.99999968E-21 : f32
    %76 = vector.broadcast %cst_30 : f32 to vector<1x512xf32>
    %77 = arith.addf %75, %76 : vector<1x512xf32>
    %78 = tpu.reciprocal %77 {approx = true} : vector<1x512xf32> -> vector<1x512xf32>
    %79 = arith.mulf %72, %78 : vector<1x512xf32>
    %80 = vector.broadcast %79 : vector<1x512xf32> to vector<8x512xf32>
    %81 = arith.mulf %80, %24 : vector<8x512xf32>
    %cst_31 = arith.constant dense<0.000000e+00> : vector<8x512xf32>
    %82 = tpu.matmul %12, %81, %cst_31 {dimension_numbers = #tpu.dot_dimension_numbers<[1], [0], [0], [1], [0, 0, 1, 1], [], []>} : vector<8x8xf32>, vector<8x512xf32>, vector<8x512xf32> -> vector<8x512xf32>
    %83 = arith.addf %82, %18 : vector<8x512xf32>
    %84 = math.tanh %83 : vector<8x512xf32>
    %cst_32 = arith.constant dense<0.000000e+00> : vector<8x512xf32>
    %85 = tpu.matmul %14, %84, %cst_32 {dimension_numbers = #tpu.dot_dimension_numbers<[1], [0], [0], [1], [0, 0, 1, 1], [], []>} : vector<8x8xf32>, vector<8x512xf32>, vector<8x512xf32> -> vector<8x512xf32>
    %86 = arith.addf %85, %22 : vector<8x512xf32>
    %cst_33 = arith.constant dense<0.000000e+00> : vector<8x512xf32>
    %87 = tpu.matmul %2, %86, %cst_33 {dimension_numbers = #tpu.dot_dimension_numbers<[1], [0], [0], [1], [0, 0, 1, 1], [], []>} : vector<8x8xf32>, vector<8x512xf32>, vector<8x512xf32> -> vector<8x512xf32>
    %cst_34 = arith.constant dense<0.000000e+00> : vector<8x512xf32>
    %88 = tpu.matmul %8, %86, %cst_34 {dimension_numbers = #tpu.dot_dimension_numbers<[1], [0], [0], [1], [0, 0, 1, 1], [], []>} : vector<8x8xf32>, vector<8x512xf32>, vector<8x512xf32> -> vector<8x512xf32>
    %cst_35 = arith.constant dense<0.000000e+00> : vector<8x512xf32>
    %89 = tpu.matmul %10, %86, %cst_35 {dimension_numbers = #tpu.dot_dimension_numbers<[1], [0], [0], [1], [0, 0, 1, 1], [], []>} : vector<8x8xf32>, vector<8x512xf32>, vector<8x512xf32> -> vector<8x512xf32>
    %90 = arith.subf %0, %87 : vector<8x512xf32>
    %91 = arith.subf %24, %88 : vector<8x512xf32>
    %92 = arith.subf %25, %89 : vector<8x512xf32>
    %93 = arith.mulf %90, %92 : vector<8x512xf32>
    %94 = arith.mulf %92, %92 : vector<8x512xf32>
    %cst_36 = arith.constant 0.000000e+00 : f32
    %95 = vector.broadcast %cst_36 : f32 to vector<1x512xf32>
    %cst_37 = arith.constant 0.000000e+00 : f32
    %96 = vector.broadcast %cst_37 : f32 to vector<1x512xf32>
    %97 = vector.extract_strided_slice %93 {offsets = [0, 0], sizes = [8, 256], strides = [1, 1]} : vector<8x512xf32> to vector<8x256xf32>
    %98 = vector.shape_cast %97 : vector<8x256xf32> to vector<1x8x256xf32>
    %cst_38 = arith.constant dense<0.000000e+00> : vector<1xf32>
    %99 = vector.multi_reduction <add>, %98, %cst_38 [1, 2] : vector<1x8x256xf32> to vector<1xf32>
    %100 = vector.shape_cast %99 : vector<1xf32> to vector<1x1x1xf32>
    %101 = vector.extract %100[0, 0, 0] : f32 from vector<1x1x1xf32>
    %102 = vector.broadcast %101 : f32 to vector<1x1xf32>
    %103 = vector.extract_strided_slice %94 {offsets = [0, 0], sizes = [8, 256], strides = [1, 1]} : vector<8x512xf32> to vector<8x256xf32>
    %104 = vector.shape_cast %103 : vector<8x256xf32> to vector<1x8x256xf32>
    %cst_39 = arith.constant dense<0.000000e+00> : vector<1xf32>
    %105 = vector.multi_reduction <add>, %104, %cst_39 [1, 2] : vector<1x8x256xf32> to vector<1xf32>
    %106 = vector.shape_cast %105 : vector<1xf32> to vector<1x1x1xf32>
    %107 = vector.extract %106[0, 0, 0] : f32 from vector<1x1x1xf32>
    %108 = vector.broadcast %107 : f32 to vector<1x1xf32>
    %c0_i32_40 = arith.constant 0 : i32
    %109 = vector.broadcast %c0_i32_40 : i32 to vector<1x512xi32>
    %110 = arith.cmpi sge, %23, %109 : vector<1x512xi32>
    %c256_i32_41 = arith.constant 256 : i32
    %111 = vector.broadcast %c256_i32_41 : i32 to vector<1x512xi32>
    %112 = arith.cmpi slt, %23, %111 : vector<1x512xi32>
    %113 = arith.andi %110, %112 : vector<1x512xi1>
    %114 = vector.shape_cast %102 : vector<1x1xf32> to vector<1x1xf32>
    %115 = vector.broadcast %114 : vector<1x1xf32> to vector<1x512xf32>
    %116 = arith.select %113, %115, %95 : vector<1x512xi1>, vector<1x512xf32>
    %117 = vector.shape_cast %108 : vector<1x1xf32> to vector<1x1xf32>
    %118 = vector.broadcast %117 : vector<1x1xf32> to vector<1x512xf32>
    %119 = arith.select %113, %118, %96 : vector<1x512xi1>, vector<1x512xf32>
    %120 = vector.extract_strided_slice %93 {offsets = [0, 256], sizes = [8, 256], strides = [1, 1]} : vector<8x512xf32> to vector<8x256xf32>
    %121 = vector.shape_cast %120 : vector<8x256xf32> to vector<1x8x256xf32>
    %cst_42 = arith.constant dense<0.000000e+00> : vector<1xf32>
    %122 = vector.multi_reduction <add>, %121, %cst_42 [1, 2] : vector<1x8x256xf32> to vector<1xf32>
    %123 = vector.shape_cast %122 : vector<1xf32> to vector<1x1x1xf32>
    %124 = vector.extract %123[0, 0, 0] : f32 from vector<1x1x1xf32>
    %125 = vector.broadcast %124 : f32 to vector<1x1xf32>
    %126 = vector.extract_strided_slice %94 {offsets = [0, 256], sizes = [8, 256], strides = [1, 1]} : vector<8x512xf32> to vector<8x256xf32>
    %127 = vector.shape_cast %126 : vector<8x256xf32> to vector<1x8x256xf32>
    %cst_43 = arith.constant dense<0.000000e+00> : vector<1xf32>
    %128 = vector.multi_reduction <add>, %127, %cst_43 [1, 2] : vector<1x8x256xf32> to vector<1xf32>
    %129 = vector.shape_cast %128 : vector<1xf32> to vector<1x1x1xf32>
    %130 = vector.extract %129[0, 0, 0] : f32 from vector<1x1x1xf32>
    %131 = vector.broadcast %130 : f32 to vector<1x1xf32>
    %c256_i32_44 = arith.constant 256 : i32
    %132 = vector.broadcast %c256_i32_44 : i32 to vector<1x512xi32>
    %133 = arith.cmpi sge, %23, %132 : vector<1x512xi32>
    %c512_i32_45 = arith.constant 512 : i32
    %134 = vector.broadcast %c512_i32_45 : i32 to vector<1x512xi32>
    %135 = arith.cmpi slt, %23, %134 : vector<1x512xi32>
    %136 = arith.andi %133, %135 : vector<1x512xi1>
    %137 = vector.shape_cast %125 : vector<1x1xf32> to vector<1x1xf32>
    %138 = vector.broadcast %137 : vector<1x1xf32> to vector<1x512xf32>
    %139 = arith.select %136, %138, %116 : vector<1x512xi1>, vector<1x512xf32>
    %140 = vector.shape_cast %131 : vector<1x1xf32> to vector<1x1xf32>
    %141 = vector.broadcast %140 : vector<1x1xf32> to vector<1x512xf32>
    %142 = arith.select %136, %141, %119 : vector<1x512xi1>, vector<1x512xf32>
    %cst_46 = arith.constant 9.99999968E-21 : f32
    %143 = vector.broadcast %cst_46 : f32 to vector<1x512xf32>
    %144 = arith.addf %142, %143 : vector<1x512xf32>
    %145 = tpu.reciprocal %144 {approx = true} : vector<1x512xf32> -> vector<1x512xf32>
    %146 = arith.mulf %139, %145 : vector<1x512xf32>
    %147 = vector.broadcast %146 : vector<1x512xf32> to vector<8x512xf32>
    %148 = arith.mulf %147, %91 : vector<8x512xf32>
    %149 = arith.addf %86, %148 : vector<8x512xf32>
    %cst_47 = arith.constant dense<0.000000e+00> : vector<8x512xf32>
    %150 = tpu.matmul %12, %149, %cst_47 {dimension_numbers = #tpu.dot_dimension_numbers<[1], [0], [0], [1], [0, 0, 1, 1], [], []>} : vector<8x8xf32>, vector<8x512xf32>, vector<8x512xf32> -> vector<8x512xf32>
    %151 = arith.addf %150, %18 : vector<8x512xf32>
    %152 = math.tanh %151 : vector<8x512xf32>
    %cst_48 = arith.constant dense<0.000000e+00> : vector<8x512xf32>
    %153 = tpu.matmul %14, %152, %cst_48 {dimension_numbers = #tpu.dot_dimension_numbers<[1], [0], [0], [1], [0, 0, 1, 1], [], []>} : vector<8x8xf32>, vector<8x512xf32>, vector<8x512xf32> -> vector<8x512xf32>
    %154 = arith.addf %153, %22 : vector<8x512xf32>
    %cst_49 = arith.constant dense<0.000000e+00> : vector<8x512xf32>
    %155 = tpu.matmul %2, %154, %cst_49 {dimension_numbers = #tpu.dot_dimension_numbers<[1], [0], [0], [1], [0, 0, 1, 1], [], []>} : vector<8x8xf32>, vector<8x512xf32>, vector<8x512xf32> -> vector<8x512xf32>
    %cst_50 = arith.constant dense<0.000000e+00> : vector<8x512xf32>
    %156 = tpu.matmul %8, %154, %cst_50 {dimension_numbers = #tpu.dot_dimension_numbers<[1], [0], [0], [1], [0, 0, 1, 1], [], []>} : vector<8x8xf32>, vector<8x512xf32>, vector<8x512xf32> -> vector<8x512xf32>
    %cst_51 = arith.constant dense<0.000000e+00> : vector<8x512xf32>
    %157 = tpu.matmul %10, %154, %cst_51 {dimension_numbers = #tpu.dot_dimension_numbers<[1], [0], [0], [1], [0, 0, 1, 1], [], []>} : vector<8x8xf32>, vector<8x512xf32>, vector<8x512xf32> -> vector<8x512xf32>
    %158 = arith.subf %0, %155 : vector<8x512xf32>
    %159 = arith.subf %24, %156 : vector<8x512xf32>
    %160 = arith.subf %25, %157 : vector<8x512xf32>
    %161 = arith.mulf %158, %160 : vector<8x512xf32>
    %162 = arith.mulf %160, %160 : vector<8x512xf32>
    %cst_52 = arith.constant 0.000000e+00 : f32
    %163 = vector.broadcast %cst_52 : f32 to vector<1x512xf32>
    %cst_53 = arith.constant 0.000000e+00 : f32
    %164 = vector.broadcast %cst_53 : f32 to vector<1x512xf32>
    %165 = vector.extract_strided_slice %161 {offsets = [0, 0], sizes = [8, 256], strides = [1, 1]} : vector<8x512xf32> to vector<8x256xf32>
    %166 = vector.shape_cast %165 : vector<8x256xf32> to vector<1x8x256xf32>
    %cst_54 = arith.constant dense<0.000000e+00> : vector<1xf32>
    %167 = vector.multi_reduction <add>, %166, %cst_54 [1, 2] : vector<1x8x256xf32> to vector<1xf32>
    %168 = vector.shape_cast %167 : vector<1xf32> to vector<1x1x1xf32>
    %169 = vector.extract %168[0, 0, 0] : f32 from vector<1x1x1xf32>
    %170 = vector.broadcast %169 : f32 to vector<1x1xf32>
    %171 = vector.extract_strided_slice %162 {offsets = [0, 0], sizes = [8, 256], strides = [1, 1]} : vector<8x512xf32> to vector<8x256xf32>
    %172 = vector.shape_cast %171 : vector<8x256xf32> to vector<1x8x256xf32>
    %cst_55 = arith.constant dense<0.000000e+00> : vector<1xf32>
    %173 = vector.multi_reduction <add>, %172, %cst_55 [1, 2] : vector<1x8x256xf32> to vector<1xf32>
    %174 = vector.shape_cast %173 : vector<1xf32> to vector<1x1x1xf32>
    %175 = vector.extract %174[0, 0, 0] : f32 from vector<1x1x1xf32>
    %176 = vector.broadcast %175 : f32 to vector<1x1xf32>
    %c0_i32_56 = arith.constant 0 : i32
    %177 = vector.broadcast %c0_i32_56 : i32 to vector<1x512xi32>
    %178 = arith.cmpi sge, %23, %177 : vector<1x512xi32>
    %c256_i32_57 = arith.constant 256 : i32
    %179 = vector.broadcast %c256_i32_57 : i32 to vector<1x512xi32>
    %180 = arith.cmpi slt, %23, %179 : vector<1x512xi32>
    %181 = arith.andi %178, %180 : vector<1x512xi1>
    %182 = vector.shape_cast %170 : vector<1x1xf32> to vector<1x1xf32>
    %183 = vector.broadcast %182 : vector<1x1xf32> to vector<1x512xf32>
    %184 = arith.select %181, %183, %163 : vector<1x512xi1>, vector<1x512xf32>
    %185 = vector.shape_cast %176 : vector<1x1xf32> to vector<1x1xf32>
    %186 = vector.broadcast %185 : vector<1x1xf32> to vector<1x512xf32>
    %187 = arith.select %181, %186, %164 : vector<1x512xi1>, vector<1x512xf32>
    %188 = vector.extract_strided_slice %161 {offsets = [0, 256], sizes = [8, 256], strides = [1, 1]} : vector<8x512xf32> to vector<8x256xf32>
    %189 = vector.shape_cast %188 : vector<8x256xf32> to vector<1x8x256xf32>
    %cst_58 = arith.constant dense<0.000000e+00> : vector<1xf32>
    %190 = vector.multi_reduction <add>, %189, %cst_58 [1, 2] : vector<1x8x256xf32> to vector<1xf32>
    %191 = vector.shape_cast %190 : vector<1xf32> to vector<1x1x1xf32>
    %192 = vector.extract %191[0, 0, 0] : f32 from vector<1x1x1xf32>
    %193 = vector.broadcast %192 : f32 to vector<1x1xf32>
    %194 = vector.extract_strided_slice %162 {offsets = [0, 256], sizes = [8, 256], strides = [1, 1]} : vector<8x512xf32> to vector<8x256xf32>
    %195 = vector.shape_cast %194 : vector<8x256xf32> to vector<1x8x256xf32>
    %cst_59 = arith.constant dense<0.000000e+00> : vector<1xf32>
    %196 = vector.multi_reduction <add>, %195, %cst_59 [1, 2] : vector<1x8x256xf32> to vector<1xf32>
    %197 = vector.shape_cast %196 : vector<1xf32> to vector<1x1x1xf32>
    %198 = vector.extract %197[0, 0, 0] : f32 from vector<1x1x1xf32>
    %199 = vector.broadcast %198 : f32 to vector<1x1xf32>
    %c256_i32_60 = arith.constant 256 : i32
    %200 = vector.broadcast %c256_i32_60 : i32 to vector<1x512xi32>
    %201 = arith.cmpi sge, %23, %200 : vector<1x512xi32>
    %c512_i32_61 = arith.constant 512 : i32
    %202 = vector.broadcast %c512_i32_61 : i32 to vector<1x512xi32>
    %203 = arith.cmpi slt, %23, %202 : vector<1x512xi32>
    %204 = arith.andi %201, %203 : vector<1x512xi1>
    %205 = vector.shape_cast %193 : vector<1x1xf32> to vector<1x1xf32>
    %206 = vector.broadcast %205 : vector<1x1xf32> to vector<1x512xf32>
    %207 = arith.select %204, %206, %184 : vector<1x512xi1>, vector<1x512xf32>
    %208 = vector.shape_cast %199 : vector<1x1xf32> to vector<1x1xf32>
    %209 = vector.broadcast %208 : vector<1x1xf32> to vector<1x512xf32>
    %210 = arith.select %204, %209, %187 : vector<1x512xi1>, vector<1x512xf32>
    %cst_62 = arith.constant 9.99999968E-21 : f32
    %211 = vector.broadcast %cst_62 : f32 to vector<1x512xf32>
    %212 = arith.addf %210, %211 : vector<1x512xf32>
    %213 = tpu.reciprocal %212 {approx = true} : vector<1x512xf32> -> vector<1x512xf32>
    %214 = arith.mulf %207, %213 : vector<1x512xf32>
    %215 = vector.broadcast %214 : vector<1x512xf32> to vector<8x512xf32>
    %216 = arith.mulf %215, %159 : vector<8x512xf32>
    %217 = arith.addf %154, %216 : vector<8x512xf32>
    %c0_63 = arith.constant 0 : index
    %c0_64 = arith.constant 0 : index
    %218 = vector.load %arg3[%c0_63, %c0_64] : memref<8x512xf32, #tpu.memory_space<vmem>>, vector<8x512xf32>
    tpu.vector_store %arg3[%c0_63, %c0_64], %217 {strides = array<i32>} : memref<8x512xf32, #tpu.memory_space<vmem>>, vector<8x512xf32>,
    %c0_65 = arith.constant 0 : index
    %c0_66 = arith.constant 0 : index
    %219 = vector.load %arg4[%c0_65, %c0_66] : memref<8x512xf32, #tpu.memory_space<vmem>>, vector<8x512xf32>
    tpu.vector_store %arg4[%c0_65, %c0_66], %154 {strides = array<i32>} : memref<8x512xf32, #tpu.memory_space<vmem>>, vector<8x512xf32>,
    return
  }
}

</mosaic_0001>

<llo_original>
// kernel: neural_proximal_gradient_forward.1
$region0: #{neural_proximal_gradient_forward.1}
  #allocation0 [shape = 'u32[]', space=smem, size = 0x4, offset = 0x4, fixed_abs, tag = 'smem constant byte address 0x4 - core index']
  #allocation1 [shape = 'u32[144,128]{1,0:T(1,128)}', space=vmem, size = 0x12000, scoped, tag = 'internal scratch']
  %s0 = inlined_call_operand.vmem [shape: f32[8,512], index: 0, kind: input, shape index: {}]
  %s1 = inlined_call_operand.vmem [shape: f32[7,8,8], index: 1, kind: input, shape index: {}]
  %s2 = inlined_call_operand.vmem [shape: f32[2,8,1], index: 2, kind: input, shape index: {}]
  %s3 = inlined_call_operand.vmem [shape: f32[8,512], index: 3, kind: output, shape index: {0}]
  %s4 = inlined_call_operand.vmem [shape: f32[8,512], index: 4, kind: output, shape index: {1}]
  %5 = xla_tuple %s3, %s4
  %s6 = sld [smem:[#allocation0]]
  $region30: #{neural_proximal_gradient_forward.1} parent=0
    _
  %s8 = ssub.s32 1, %s6
  %s9 = scalar_select 0, %s8, %s6
  // Predicated region
  $region2: #{neural_proximal_gradient_forward.1} parent=0 // pred_check
    _
  $region3: #{neural_proximal_gradient_forward.1} parent=0 // pred_check_branch
    %11 = sbr.rel (0) target = $region5
  $region4: #{neural_proximal_gradient_forward.1} parent=0 // pred_region
    _
  $region5: #{neural_proximal_gradient_forward.1} parent=0 // pred_fallthru
    _
  // Predicated region
  $region6: #{neural_proximal_gradient_forward.1} parent=0 // pred_check
    _
  $region7: #{neural_proximal_gradient_forward.1} parent=0 // pred_check_branch
    %13 = sbr.rel (0) target = $region9
  $region8: #{neural_proximal_gradient_forward.1} parent=0 // pred_region
    _
  $region9: #{neural_proximal_gradient_forward.1} parent=0 // pred_fallthru
    _
  // Predicated region
  $region10: #{neural_proximal_gradient_forward.1} parent=0 // pred_check
    _
  $region11: #{neural_proximal_gradient_forward.1} parent=0 // pred_check_branch
    %15 = sbr.rel (0) target = $region13
  $region12: #{neural_proximal_gradient_forward.1} parent=0 // pred_region
    _
  $region13: #{neural_proximal_gradient_forward.1} parent=0 // pred_fallthru
    _
  %v16 = vld [vmem:[%s0] sm:$0xff]
  %v17 = vld [vmem:[%s0 + $0x8] sm:$0xff]
  %v18 = vld [vmem:[%s0 + $0x10] sm:$0xff]
  %v19 = vld [vmem:[%s0 + $0x18] sm:$0xff]
  %v20 = vld [vmem:[%s1] sm:$0xff]
  %s21 = scalar_lea.vmem %s1, 8
  %v22 = vld [vmem:[%s21] sm:$0xff]
  %s23 = scalar_lea.vmem %s1, 16
  %v24 = vld [vmem:[%s23] sm:$0xff]
  %s25 = scalar_lea.vmem %s1, 24
  %v26 = vld [vmem:[%s25] sm:$0xff]
  %s27 = scalar_lea.vmem %s1, 32
  %v28 = vld [vmem:[%s27] sm:$0xff]
  %s29 = scalar_lea.vmem %s1, 40
  %v30 = vld [vmem:[%s29] sm:$0xff]
  %s31 = scalar_lea.vmem %s1, 48
  %v32 = vld [vmem:[%s31] sm:$0xff]
  %v33 = vld [vmem:[%s2] sm:$0xff]
  %35 = vset.pattern.permute.xlu0 0
  %36 = vperm.xlu0 %35, %v33
  %v37 = vpop.permute.xlu0 %36
  %s39 = scalar_lea.vmem %s2, 8
  %v40 = vld [vmem:[%s39] sm:$0xff]
  %42 = vset.pattern.permute.xlu0 0
  %43 = vperm.xlu0 %42, %v40
  %v44 = vpop.permute.xlu0 %43
  %v46 = vlaneseq
  %v47 = vand.u32 %v46, 127
  %v48 = vadd.s32 %v47, 128
  %v49 = vadd.s32 %v47, 256
  %v50 = vadd.s32 %v47, 384
  %vm51 = vcmask 64512
  %v53 = vsel %vm51, %v22, 0
  %55 = vmatprep.subr.mxu0 0.0
  %56 = vmatpush1.msra.mxu0 0.0
  %57 = vmatprep.subr.mxu0 0.0
  %58 = vmatpush1.msra.mxu0 0.0
  %59 = vmatprep.subr.mxu0 0.0
  %60 = vmatpush1.msra.mxu0 0.0
  %61 = vmatprep.subr.mxu0 0.0
  %62 = vmatpush1.msra.mxu0 0.0
  %63 = vmatprep.subr.mxu0 0.0
  %64 = vmatpush1.msra.mxu0 0.0
  %65 = vmatprep.subr.mxu0 0.0
  %66 = vmatpush1.msra.mxu0 0.0
  %67 = vmatprep.subr.mxu0 0.0
  %68 = vmatpush1.msra.mxu0 0.0
  %69 = vmatprep.subr.mxu0 0.0
  %70 = vmatpush1.msra.mxu0 0.0
  %71 = vmatprep.subr.mxu0 0.0
  %72 = vmatpush1.msra.mxu0 0.0
  %73 = vmatprep.subr.mxu0 0.0
  %74 = vmatpush1.msra.mxu0 0.0
  %75 = vmatprep.subr.mxu0 0.0
  %76 = vmatpush1.msra.mxu0 0.0
  %77 = vmatprep.subr.mxu0 0.0
  %78 = vmatpush1.msra.mxu0 0.0
  %79 = vmatprep.subr.mxu0 0.0
  %80 = vmatpush1.msra.mxu0 0.0
  %81 = vmatprep.subr.mxu0 0.0
  %82 = vmatpush1.msra.mxu0 0.0
  %83 = vmatprep.subr.mxu0 0.0
  %84 = vmatpush1.msra.mxu0 0.0
  %85 = vmatprep.subr.mxu0 %v17
  %86 = vmatpush1.msra.mxu0 %v16
  %87 = vmatprep.subr.mxu0 0.0
  %88 = vmatpush2.msra.mxu0 0.0
  %89 = vmatprep.subr.mxu0 0.0
  %90 = vmatpush2.msra.mxu0 0.0
  %91 = vmatprep.subr.mxu0 0.0
  %92 = vmatpush2.msra.mxu0 0.0
  %93 = vmatprep.subr.mxu0 0.0
  %94 = vmatpush2.msra.mxu0 0.0
  %95 = vmatprep.subr.mxu0 0.0
  %96 = vmatpush2.msra.mxu0 0.0
  %97 = vmatprep.subr.mxu0 0.0
  %98 = vmatpush2.msra.mxu0 0.0
  %99 = vmatprep.subr.mxu0 0.0
  %100 = vmatpush2.msra.mxu0 0.0
  %101 = vmatprep.subr.mxu0 0.0
  %102 = vmatpush2.msra.mxu0 0.0
  %103 = vmatprep.subr.mxu0 0.0
  %104 = vmatpush2.msra.mxu0 0.0
  %105 = vmatprep.subr.mxu0 0.0
  %106 = vmatpush2.msra.mxu0 0.0
  %107 = vmatprep.subr.mxu0 0.0
  %108 = vmatpush2.msra.mxu0 0.0
  %109 = vmatprep.subr.mxu0 0.0
  %110 = vmatpush2.msra.mxu0 0.0
  %111 = vmatprep.subr.mxu0 0.0
  %112 = vmatpush2.msra.mxu0 0.0
  %113 = vmatprep.subr.mxu0 0.0
  %114 = vmatpush2.msra.mxu0 0.0
  %115 = vmatprep.subr.mxu0 0.0
  %116 = vmatpush2.msra.mxu0 0.0
  %117 = vmatprep.subr.mxu0 0.0
  %118 = vmatpush2.msra.mxu0 0.0
  %119 = vmatprep.mubr.f32.mxu0 0.0
  %120 = vmatmul.mubr.f32.gmra.mxu0 %v53
  %v121 = vpop.f32.mrf.mxu0
  %v122 = vadd.f32 0.0, %v121
  %v123 = vpop.f32.mrf.mxu0
  %v124 = vadd.f32 0.0, %v123
  %125 = vdwg.mxu0
  %126 = vmatprep.subr.mxu0 0.0
  %127 = vmatpush1.msra.mxu0 0.0
  %128 = vmatprep.subr.mxu0 0.0
  %129 = vmatpush1.msra.mxu0 0.0
  %130 = vmatprep.subr.mxu0 0.0
  %131 = vmatpush1.msra.mxu0 0.0
  %132 = vmatprep.subr.mxu0 0.0
  %133 = vmatpush1.msra.mxu0 0.0
  %134 = vmatprep.subr.mxu0 0.0
  %135 = vmatpush1.msra.mxu0 0.0
  %136 = vmatprep.subr.mxu0 0.0
  %137 = vmatpush1.msra.mxu0 0.0
  %138 = vmatprep.subr.mxu0 0.0
  %139 = vmatpush1.msra.mxu0 0.0
  %140 = vmatprep.subr.mxu0 0.0
  %141 = vmatpush1.msra.mxu0 0.0
  %142 = vmatprep.subr.mxu0 0.0
  %143 = vmatpush1.msra.mxu0 0.0
  %144 = vmatprep.subr.mxu0 0.0
  %145 = vmatpush1.msra.mxu0 0.0
  %146 = vmatprep.subr.mxu0 0.0
  %147 = vmatpush1.msra.mxu0 0.0
  %148 = vmatprep.subr.mxu0 0.0
  %149 = vmatpush1.msra.mxu0 0.0
  %150 = vmatprep.subr.mxu0 0.0
  %151 = vmatpush1.msra.mxu0 0.0
  %152 = vmatprep.subr.mxu0 0.0
  %153 = vmatpush1.msra.mxu0 0.0
  %154 = vmatprep.subr.mxu0 0.0
  %155 = vmatpush1.msra.mxu0 0.0
  %156 = vmatprep.subr.mxu0 %v19
  %157 = vmatpush1.msra.mxu0 %v18
  %158 = vmatprep.subr.mxu0 0.0
  %159 = vmatpush2.msra.mxu0 0.0
  %160 = vmatprep.subr.mxu0 0.0
  %161 = vmatpush2.msra.mxu0 0.0
  %162 = vmatprep.subr.mxu0 0.0
  %163 = vmatpush2.msra.mxu0 0.0
  %164 = vmatprep.subr.mxu0 0.0
  %165 = vmatpush2.msra.mxu0 0.0
  %166 = vmatprep.subr.mxu0 0.0
  %167 = vmatpush2.msra.mxu0 0.0
  %168 = vmatprep.subr.mxu0 0.0
  %169 = vmatpush2.msra.mxu0 0.0
  %170 = vmatprep.subr.mxu0 0.0
  %171 = vmatpush2.msra.mxu0 0.0
  %172 = vmatprep.subr.mxu0 0.0
  %173 = vmatpush2.msra.mxu0 0.0
  %174 = vmatprep.subr.mxu0 0.0
  %175 = vmatpush2.msra.mxu0 0.0
  %176 = vmatprep.subr.mxu0 0.0
  %177 = vmatpush2.msra.mxu0 0.0
  %178 = vmatprep.subr.mxu0 0.0
  %179 = vmatpush2.msra.mxu0 0.0
  %180 = vmatprep.subr.mxu0 0.0
  %181 = vmatpush2.msra.mxu0 0.0
  %182 = vmatprep.subr.mxu0 0.0
  %183 = vmatpush2.msra.mxu0 0.0
  %184 = vmatprep.subr.mxu0 0.0
  %185 = vmatpush2.msra.mxu0 0.0
  %186 = vmatprep.subr.mxu0 0.0
  %187 = vmatpush2.msra.mxu0 0.0
  %188 = vmatprep.subr.mxu0 0.0
  %189 = vmatpush2.msra.mxu0 0.0
  %190 = vmatprep.mubr.f32.mxu0 0.0
  %191 = vmatmul.mubr.f32.gmra.mxu0 %v53
  %v192 = vpop.f32.mrf.mxu0
  %v193 = vadd.f32 0.0, %v192
  %v194 = vpop.f32.mrf.mxu0
  %v195 = vadd.f32 0.0, %v194
  %196 = vdwg.mxu0
  %v198 = vsel %vm51, %v24, 0
  %200 = vmatprep.subr.mxu0 0.0
  %201 = vmatpush1.msra.mxu0 0.0
  %202 = vmatprep.subr.mxu0 0.0
  %203 = vmatpush1.msra.mxu0 0.0
  %204 = vmatprep.subr.mxu0 0.0
  %205 = vmatpush1.msra.mxu0 0.0
  %206 = vmatprep.subr.mxu0 0.0
  %207 = vmatpush1.msra.mxu0 0.0
  %208 = vmatprep.subr.mxu0 0.0
  %209 = vmatpush1.msra.mxu0 0.0
  %210 = vmatprep.subr.mxu0 0.0
  %211 = vmatpush1.msra.mxu0 0.0
  %212 = vmatprep.subr.mxu0 0.0
  %213 = vmatpush1.msra.mxu0 0.0
  %214 = vmatprep.subr.mxu0 0.0
  %215 = vmatpush1.msra.mxu0 0.0
  %216 = vmatprep.subr.mxu0 0.0
  %217 = vmatpush1.msra.mxu0 0.0
  %218 = vmatprep.subr.mxu0 0.0
  %219 = vmatpush1.msra.mxu0 0.0
  %220 = vmatprep.subr.mxu0 0.0
  %221 = vmatpush1.msra.mxu0 0.0
  %222 = vmatprep.subr.mxu0 0.0
  %223 = vmatpush1.msra.mxu0 0.0
  %224 = vmatprep.subr.mxu0 0.0
  %225 = vmatpush1.msra.mxu0 0.0
  %226 = vmatprep.subr.mxu0 0.0
  %227 = vmatpush1.msra.mxu0 0.0
  %228 = vmatprep.subr.mxu0 0.0
  %229 = vmatpush1.msra.mxu0 0.0
  %230 = vmatprep.subr.mxu0 %v17
  %231 = vmatpush1.msra.mxu0 %v16
  %232 = vmatprep.subr.mxu0 0.0
  %233 = vmatpush2.msra.mxu0 0.0
  %234 = vmatprep.subr.mxu0 0.0
  %235 = vmatpush2.msra.mxu0 0.0
  %236 = vmatprep.subr.mxu0 0.0
  %237 = vmatpush2.msra.mxu0 0.0
  %238 = vmatprep.subr.mxu0 0.0
  %239 = vmatpush2.msra.mxu0 0.0
  %240 = vmatprep.subr.mxu0 0.0
  %241 = vmatpush2.msra.mxu0 0.0
  %242 = vmatprep.subr.mxu0 0.0
  %243 = vmatpush2.msra.mxu0 0.0
  %244 = vmatprep.subr.mxu0 0.0
  %245 = vmatpush2.msra.mxu0 0.0
  %246 = vmatprep.subr.mxu0 0.0
  %247 = vmatpush2.msra.mxu0 0.0
  %248 = vmatprep.subr.mxu0 0.0
  %249 = vmatpush2.msra.mxu0 0.0
  %250 = vmatprep.subr.mxu0 0.0
  %251 = vmatpush2.msra.mxu0 0.0
  %252 = vmatprep.subr.mxu0 0.0
  %253 = vmatpush2.msra.mxu0 0.0
  %254 = vmatprep.subr.mxu0 0.0
  %255 = vmatpush2.msra.mxu0 0.0
  %256 = vmatprep.subr.mxu0 0.0
  %257 = vmatpush2.msra.mxu0 0.0
  %258 = vmatprep.subr.mxu0 0.0
  %259 = vmatpush2.msra.mxu0 0.0
  %260 = vmatprep.subr.mxu0 0.0
  %261 = vmatpush2.msra.mxu0 0.0
  %262 = vmatprep.subr.mxu0 0.0
  %263 = vmatpush2.msra.mxu0 0.0
  %264 = vmatprep.mubr.f32.mxu0 0.0
  %265 = vmatmul.mubr.f32.gmra.mxu0 %v198
  %v266 = vpop.f32.mrf.mxu0
  %v267 = vadd.f32 0.0, %v266
  %v268 = vpop.f32.mrf.mxu0
  %v269 = vadd.f32 0.0, %v268
  %270 = vdwg.mxu0
  %271 = vmatprep.subr.mxu0 0.0
  %272 = vmatpush1.msra.mxu0 0.0
  %273 = vmatprep.subr.mxu0 0.0
  %274 = vmatpush1.msra.mxu0 0.0
  %275 = vmatprep.subr.mxu0 0.0
  %276 = vmatpush1.msra.mxu0 0.0
  %277 = vmatprep.subr.mxu0 0.0
  %278 = vmatpush1.msra.mxu0 0.0
  %279 = vmatprep.subr.mxu0 0.0
  %280 = vmatpush1.msra.mxu0 0.0
  %281 = vmatprep.subr.mxu0 0.0
  %282 = vmatpush1.msra.mxu0 0.0
  %283 = vmatprep.subr.mxu0 0.0
  %284 = vmatpush1.msra.mxu0 0.0
  %285 = vmatprep.subr.mxu0 0.0
  %286 = vmatpush1.msra.mxu0 0.0
  %287 = vmatprep.subr.mxu0 0.0
  %288 = vmatpush1.msra.mxu0 0.0
  %289 = vmatprep.subr.mxu0 0.0
  %290 = vmatpush1.msra.mxu0 0.0
  %291 = vmatprep.subr.mxu0 0.0
  %292 = vmatpush1.msra.mxu0 0.0
  %293 = vmatprep.subr.mxu0 0.0
  %294 = vmatpush1.msra.mxu0 0.0
  %295 = vmatprep.subr.mxu0 0.0
  %296 = vmatpush1.msra.mxu0 0.0
  %297 = vmatprep.subr.mxu0 0.0
  %298 = vmatpush1.msra.mxu0 0.0
  %299 = vmatprep.subr.mxu0 0.0
  %300 = vmatpush1.msra.mxu0 0.0
  %301 = vmatprep.subr.mxu0 %v19
  %302 = vmatpush1.msra.mxu0 %v18
  %303 = vmatprep.subr.mxu0 0.0
  %304 = vmatpush2.msra.mxu0 0.0
  %305 = vmatprep.subr.mxu0 0.0
  %306 = vmatpush2.msra.mxu0 0.0
  %307 = vmatprep.subr.mxu0 0.0
  %308 = vmatpush2.msra.mxu0 0.0
  %309 = vmatprep.subr.mxu0 0.0
  %310 = vmatpush2.msra.mxu0 0.0
  %311 = vmatprep.subr.mxu0 0.0
  %312 = vmatpush2.msra.mxu0 0.0
  %313 = vmatprep.subr.mxu0 0.0
  %314 = vmatpush2.msra.mxu0 0.0
  %315 = vmatprep.subr.mxu0 0.0
  %316 = vmatpush2.msra.mxu0 0.0
  %317 = vmatprep.subr.mxu0 0.0
  %318 = vmatpush2.msra.mxu0 0.0
  %319 = vmatprep.subr.mxu0 0.0
  %320 = vmatpush2.msra.mxu0 0.0
  %321 = vmatprep.subr.mxu0 0.0
  %322 = vmatpush2.msra.mxu0 0.0
  %323 = vmatprep.subr.mxu0 0.0
  %324 = vmatpush2.msra.mxu0 0.0
  %325 = vmatprep.subr.mxu0 0.0
  %326 = vmatpush2.msra.mxu0 0.0
  %327 = vmatprep.subr.mxu0 0.0
  %328 = vmatpush2.msra.mxu0 0.0
  %329 = vmatprep.subr.mxu0 0.0
  %330 = vmatpush2.msra.mxu0 0.0
  %331 = vmatprep.subr.mxu0 0.0
  %332 = vmatpush2.msra.mxu0 0.0
  %333 = vmatprep.subr.mxu0 0.0
  %334 = vmatpush2.msra.mxu0 0.0
  %335 = vmatprep.mubr.f32.mxu0 0.0
  %336 = vmatmul.mubr.f32.gmra.mxu0 %v198
  %v337 = vpop.f32.mrf.mxu0
  %v338 = vadd.f32 0.0, %v337
  %v339 = vpop.f32.mrf.mxu0
  %v340 = vadd.f32 0.0, %v339
  %341 = vdwg.mxu0
  %v342 = vmul.f32 %v16, %v267
  %v343 = vmul.f32 %v17, %v269
  %v344 = vmul.f32 %v18, %v338
  %v345 = vmul.f32 %v19, %v340
  %v346 = vmul.f32 %v267, %v267
  %v347 = vmul.f32 %v269, %v269
  %v348 = vmul.f32 %v338, %v338
  %v349 = vmul.f32 %v340, %v340
  %v350 = vadd.f32 %v342, %v343
  %351 = vadd.xlane.f32.xlu0 %v350
  %v352 = vpop.xlane.xlu0 %351
  %v353 = vrot.slane %v352, 4
  %v354 = vadd.f32 %v352, %v353
  %v355 = vrot.slane %v354, 2
  %v356 = vadd.f32 %v354, %v355
  %v357 = vrot.slane %v356, 1
  %v358 = vadd.f32 %v356, %v357
  %s359 = vtos %v358
  %v360 = vadd.f32 %v346, %v347
  %361 = vadd.xlane.f32.xlu0 %v360
  %v362 = vpop.xlane.xlu0 %361
  %v363 = vrot.slane %v362, 4
  %v364 = vadd.f32 %v362, %v363
  %v365 = vrot.slane %v364, 2
  %v366 = vadd.f32 %v364, %v365
  %v367 = vrot.slane %v366, 1
  %v368 = vadd.f32 %v366, %v367
  %s369 = vtos %v368
  %vm370 = vcmp.ge.s32.totalorder %v47, 0
  %vm371 = vcmp.ge.s32.totalorder %v48, 0
  %vm372 = vcmp.ge.s32.totalorder %v49, 0
  %vm373 = vcmp.ge.s32.totalorder %v50, 0
  %vm374 = vcmp.lt.s32.totalorder %v47, 256
  %vm375 = vcmp.lt.s32.totalorder %v48, 256
  %vm376 = vcmp.lt.s32.totalorder %v49, 256
  %vm377 = vcmp.lt.s32.totalorder %v50, 256
  %vm378 = vmand %vm370, %vm374
  %vm379 = vmand %vm371, %vm375
  %vm380 = vmand %vm372, %vm376
  %vm381 = vmand %vm373, %vm377
  %v382 = vstv %s359
  %v383 = vsel %vm378, %v382, 0.0
  %v384 = vsel %vm379, %v382, 0.0
  %v385 = vsel %vm380, %v382, 0.0
  %v386 = vsel %vm381, %v382, 0.0
  %v387 = vstv %s369
  %v388 = vsel %vm378, %v387, 0.0
  %v389 = vsel %vm379, %v387, 0.0
  %v390 = vsel %vm380, %v387, 0.0
  %v391 = vsel %vm381, %v387, 0.0
  %v392 = vadd.f32 %v344, %v345
  %393 = vadd.xlane.f32.xlu0 %v392
  %v394 = vpop.xlane.xlu0 %393
  %v395 = vrot.slane %v394, 4
  %v396 = vadd.f32 %v394, %v395
  %v397 = vrot.slane %v396, 2
  %v398 = vadd.f32 %v396, %v397
  %v399 = vrot.slane %v398, 1
  %v400 = vadd.f32 %v398, %v399
  %s401 = vtos %v400
  %v402 = vadd.f32 %v348, %v349
  %403 = vadd.xlane.f32.xlu0 %v402
  %v404 = vpop.xlane.xlu0 %403
  %v405 = vrot.slane %v404, 4
  %v406 = vadd.f32 %v404, %v405
  %v407 = vrot.slane %v406, 2
  %v408 = vadd.f32 %v406, %v407
  %v409 = vrot.slane %v408, 1
  %v410 = vadd.f32 %v408, %v409
  %s411 = vtos %v410
  %vm412 = vcmp.ge.s32.totalorder %v47, 256
  %vm413 = vcmp.ge.s32.totalorder %v48, 256
  %vm414 = vcmp.ge.s32.totalorder %v49, 256
  %vm415 = vcmp.ge.s32.totalorder %v50, 256
  %vm416 = vcmp.lt.s32.totalorder %v47, 512
  %vm417 = vcmp.lt.s32.totalorder %v48, 512
  %vm418 = vcmp.lt.s32.totalorder %v49, 512
  %vm419 = vcmp.lt.s32.totalorder %v50, 512
  %vm420 = vmand %vm412, %vm416
  %vm421 = vmand %vm413, %vm417
  %vm422 = vmand %vm414, %vm418
  %vm423 = vmand %vm415, %vm419
  %v424 = vstv %s401
  %v425 = vsel %vm420, %v424, %v383
  %v426 = vsel %vm421, %v424, %v384
  %v427 = vsel %vm422, %v424, %v385
  %v428 = vsel %vm423, %v424, %v386
  %v429 = vstv %s411
  %v430 = vsel %vm420, %v429, %v388
  %v431 = vsel %vm421, %v429, %v389
  %v432 = vsel %vm422, %v429, %v390
  %v433 = vsel %vm423, %v429, %v391
  %v434 = vadd.f32 %v430, 1e-20
  %v435 = vadd.f32 %v431, 1e-20
  %v436 = vadd.f32 %v432, 1e-20
  %v437 = vadd.f32 %v433, 1e-20
  %v438 = vrcp.pop %v434
  %v439 = vrcp.pop %v435
  %v440 = vrcp.pop %v436
  %v441 = vrcp.pop %v437
  %v442 = vmul.f32 %v425, %v438
  %v443 = vmul.f32 %v426, %v439
  %v444 = vmul.f32 %v427, %v440
  %v445 = vmul.f32 %v428, %v441
  %v446 = vmul.f32 %v442, %v122
  %v447 = vmul.f32 %v443, %v124
  %v448 = vmul.f32 %v444, %v193
  %v449 = vmul.f32 %v445, %v195
  %v451 = vsel %vm51, %v30, 0
  %453 = vmatprep.subr.mxu0 0.0
  %454 = vmatpush1.msra.mxu0 0.0
  %455 = vmatprep.subr.mxu0 0.0
  %456 = vmatpush1.msra.mxu0 0.0
  %457 = vmatprep.subr.mxu0 0.0
  %458 = vmatpush1.msra.mxu0 0.0
  %459 = vmatprep.subr.mxu0 0.0
  %460 = vmatpush1.msra.mxu0 0.0
  %461 = vmatprep.subr.mxu0 0.0
  %462 = vmatpush1.msra.mxu0 0.0
  %463 = vmatprep.subr.mxu0 0.0
  %464 = vmatpush1.msra.mxu0 0.0
  %465 = vmatprep.subr.mxu0 0.0
  %466 = vmatpush1.msra.mxu0 0.0
  %467 = vmatprep.subr.mxu0 0.0
  %468 = vmatpush1.msra.mxu0 0.0
  %469 = vmatprep.subr.mxu0 0.0
  %470 = vmatpush1.msra.mxu0 0.0
  %471 = vmatprep.subr.mxu0 0.0
  %472 = vmatpush1.msra.mxu0 0.0
  %473 = vmatprep.subr.mxu0 0.0
  %474 = vmatpush1.msra.mxu0 0.0
  %475 = vmatprep.subr.mxu0 0.0
  %476 = vmatpush1.msra.mxu0 0.0
  %477 = vmatprep.subr.mxu0 0.0
  %478 = vmatpush1.msra.mxu0 0.0
  %479 = vmatprep.subr.mxu0 0.0
  %480 = vmatpush1.msra.mxu0 0.0
  %481 = vmatprep.subr.mxu0 0.0
  %482 = vmatpush1.msra.mxu0 0.0
  %483 = vmatprep.subr.mxu0 %v447
  %484 = vmatpush1.msra.mxu0 %v446
  %485 = vmatprep.subr.mxu0 0.0
  %486 = vmatpush2.msra.mxu0 0.0
  %487 = vmatprep.subr.mxu0 0.0
  %488 = vmatpush2.msra.mxu0 0.0
  %489 = vmatprep.subr.mxu0 0.0
  %490 = vmatpush2.msra.mxu0 0.0
  %491 = vmatprep.subr.mxu0 0.0
  %492 = vmatpush2.msra.mxu0 0.0
  %493 = vmatprep.subr.mxu0 0.0
  %494 = vmatpush2.msra.mxu0 0.0
  %495 = vmatprep.subr.mxu0 0.0
  %496 = vmatpush2.msra.mxu0 0.0
  %497 = vmatprep.subr.mxu0 0.0
  %498 = vmatpush2.msra.mxu0 0.0
  %499 = vmatprep.subr.mxu0 0.0
  %500 = vmatpush2.msra.mxu0 0.0
  %501 = vmatprep.subr.mxu0 0.0
  %502 = vmatpush2.msra.mxu0 0.0
  %503 = vmatprep.subr.mxu0 0.0
  %504 = vmatpush2.msra.mxu0 0.0
  %505 = vmatprep.subr.mxu0 0.0
  %506 = vmatpush2.msra.mxu0 0.0
  %507 = vmatprep.subr.mxu0 0.0
  %508 = vmatpush2.msra.mxu0 0.0
  %509 = vmatprep.subr.mxu0 0.0
  %510 = vmatpush2.msra.mxu0 0.0
  %511 = vmatprep.subr.mxu0 0.0
  %512 = vmatpush2.msra.mxu0 0.0
  %513 = vmatprep.subr.mxu0 0.0
  %514 = vmatpush2.msra.mxu0 0.0
  %515 = vmatprep.subr.mxu0 0.0
  %516 = vmatpush2.msra.mxu0 0.0
  %517 = vmatprep.mubr.f32.mxu0 0.0
  %518 = vmatmul.mubr.f32.gmra.mxu0 %v451
  %v519 = vpop.f32.mrf.mxu0
  %v520 = vadd.f32 %v37, %v519
  %v521 = vpop.f32.mrf.mxu0
  %v522 = vadd.f32 %v37, %v521
  %523 = vdwg.mxu0
  %524 = vmatprep.subr.mxu0 0.0
  %525 = vmatpush1.msra.mxu0 0.0
  %526 = vmatprep.subr.mxu0 0.0
  %527 = vmatpush1.msra.mxu0 0.0
  %528 = vmatprep.subr.mxu0 0.0
  %529 = vmatpush1.msra.mxu0 0.0
  %530 = vmatprep.subr.mxu0 0.0
  %531 = vmatpush1.msra.mxu0 0.0
  %532 = vmatprep.subr.mxu0 0.0
  %533 = vmatpush1.msra.mxu0 0.0
  %534 = vmatprep.subr.mxu0 0.0
  %535 = vmatpush1.msra.mxu0 0.0
  %536 = vmatprep.subr.mxu0 0.0
  %537 = vmatpush1.msra.mxu0 0.0
  %538 = vmatprep.subr.mxu0 0.0
  %539 = vmatpush1.msra.mxu0 0.0
  %540 = vmatprep.subr.mxu0 0.0
  %541 = vmatpush1.msra.mxu0 0.0
  %542 = vmatprep.subr.mxu0 0.0
  %543 = vmatpush1.msra.mxu0 0.0
  %544 = vmatprep.subr.mxu0 0.0
  %545 = vmatpush1.msra.mxu0 0.0
  %546 = vmatprep.subr.mxu0 0.0
  %547 = vmatpush1.msra.mxu0 0.0
  %548 = vmatprep.subr.mxu0 0.0
  %549 = vmatpush1.msra.mxu0 0.0
  %550 = vmatprep.subr.mxu0 0.0
  %551 = vmatpush1.msra.mxu0 0.0
  %552 = vmatprep.subr.mxu0 0.0
  %553 = vmatpush1.msra.mxu0 0.0
  %554 = vmatprep.subr.mxu0 %v449
  %555 = vmatpush1.msra.mxu0 %v448
  %556 = vmatprep.subr.mxu0 0.0
  %557 = vmatpush2.msra.mxu0 0.0
  %558 = vmatprep.subr.mxu0 0.0
  %559 = vmatpush2.msra.mxu0 0.0
  %560 = vmatprep.subr.mxu0 0.0
  %561 = vmatpush2.msra.mxu0 0.0
  %562 = vmatprep.subr.mxu0 0.0
  %563 = vmatpush2.msra.mxu0 0.0
  %564 = vmatprep.subr.mxu0 0.0
  %565 = vmatpush2.msra.mxu0 0.0
  %566 = vmatprep.subr.mxu0 0.0
  %567 = vmatpush2.msra.mxu0 0.0
  %568 = vmatprep.subr.mxu0 0.0
  %569 = vmatpush2.msra.mxu0 0.0
  %570 = vmatprep.subr.mxu0 0.0
  %571 = vmatpush2.msra.mxu0 0.0
  %572 = vmatprep.subr.mxu0 0.0
  %573 = vmatpush2.msra.mxu0 0.0
  %574 = vmatprep.subr.mxu0 0.0
  %575 = vmatpush2.msra.mxu0 0.0
  %576 = vmatprep.subr.mxu0 0.0
  %577 = vmatpush2.msra.mxu0 0.0
  %578 = vmatprep.subr.mxu0 0.0
  %579 = vmatpush2.msra.mxu0 0.0
  %580 = vmatprep.subr.mxu0 0.0
  %581 = vmatpush2.msra.mxu0 0.0
  %582 = vmatprep.subr.mxu0 0.0
  %583 = vmatpush2.msra.mxu0 0.0
  %584 = vmatprep.subr.mxu0 0.0
  %585 = vmatpush2.msra.mxu0 0.0
  %586 = vmatprep.subr.mxu0 0.0
  %587 = vmatpush2.msra.mxu0 0.0
  %588 = vmatprep.mubr.f32.mxu0 0.0
  %589 = vmatmul.mubr.f32.gmra.mxu0 %v451
  %v590 = vpop.f32.mrf.mxu0
  %v591 = vadd.f32 %v37, %v590
  %v592 = vpop.f32.mrf.mxu0
  %v593 = vadd.f32 %v37, %v592
  %594 = vdwg.mxu0
  %v595 = vtanh.pop %v520
  %v596 = vtanh.pop %v522
  %v597 = vtanh.pop %v591
  %v598 = vtanh.pop %v593
  %v600 = vsel %vm51, %v32, 0
  %602 = vmatprep.subr.mxu0 0.0
  %603 = vmatpush1.msra.mxu0 0.0
  %604 = vmatprep.subr.mxu0 0.0
  %605 = vmatpush1.msra.mxu0 0.0
  %606 = vmatprep.subr.mxu0 0.0
  %607 = vmatpush1.msra.mxu0 0.0
  %608 = vmatprep.subr.mxu0 0.0
  %609 = vmatpush1.msra.mxu0 0.0
  %610 = vmatprep.subr.mxu0 0.0
  %611 = vmatpush1.msra.mxu0 0.0
  %612 = vmatprep.subr.mxu0 0.0
  %613 = vmatpush1.msra.mxu0 0.0
  %614 = vmatprep.subr.mxu0 0.0
  %615 = vmatpush1.msra.mxu0 0.0
  %616 = vmatprep.subr.mxu0 0.0
  %617 = vmatpush1.msra.mxu0 0.0
  %618 = vmatprep.subr.mxu0 0.0
  %619 = vmatpush1.msra.mxu0 0.0
  %620 = vmatprep.subr.mxu0 0.0
  %621 = vmatpush1.msra.mxu0 0.0
  %622 = vmatprep.subr.mxu0 0.0
  %623 = vmatpush1.msra.mxu0 0.0
  %624 = vmatprep.subr.mxu0 0.0
  %625 = vmatpush1.msra.mxu0 0.0
  %626 = vmatprep.subr.mxu0 0.0
  %627 = vmatpush1.msra.mxu0 0.0
  %628 = vmatprep.subr.mxu0 0.0
  %629 = vmatpush1.msra.mxu0 0.0
  %630 = vmatprep.subr.mxu0 0.0
  %631 = vmatpush1.msra.mxu0 0.0
  %632 = vmatprep.subr.mxu0 %v596
  %633 = vmatpush1.msra.mxu0 %v595
  %634 = vmatprep.subr.mxu0 0.0
  %635 = vmatpush2.msra.mxu0 0.0
  %636 = vmatprep.subr.mxu0 0.0
  %637 = vmatpush2.msra.mxu0 0.0
  %638 = vmatprep.subr.mxu0 0.0
  %639 = vmatpush2.msra.mxu0 0.0
  %640 = vmatprep.subr.mxu0 0.0
  %641 = vmatpush2.msra.mxu0 0.0
  %642 = vmatprep.subr.mxu0 0.0
  %643 = vmatpush2.msra.mxu0 0.0
  %644 = vmatprep.subr.mxu0 0.0
  %645 = vmatpush2.msra.mxu0 0.0
  %646 = vmatprep.subr.mxu0 0.0
  %647 = vmatpush2.msra.mxu0 0.0
  %648 = vmatprep.subr.mxu0 0.0
  %649 = vmatpush2.msra.mxu0 0.0
  %650 = vmatprep.subr.mxu0 0.0
  %651 = vmatpush2.msra.mxu0 0.0
  %652 = vmatprep.subr.mxu0 0.0
  %653 = vmatpush2.msra.mxu0 0.0
  %654 = vmatprep.subr.mxu0 0.0
  %655 = vmatpush2.msra.mxu0 0.0
  %656 = vmatprep.subr.mxu0 0.0
  %657 = vmatpush2.msra.mxu0 0.0
  %658 = vmatprep.subr.mxu0 0.0
  %659 = vmatpush2.msra.mxu0 0.0
  %660 = vmatprep.subr.mxu0 0.0
  %661 = vmatpush2.msra.mxu0 0.0
  %662 = vmatprep.subr.mxu0 0.0
  %663 = vmatpush2.msra.mxu0 0.0
  %664 = vmatprep.subr.mxu0 0.0
  %665 = vmatpush2.msra.mxu0 0.0
  %666 = vmatprep.mubr.f32.mxu0 0.0
  %667 = vmatmul.mubr.f32.gmra.mxu0 %v600
  %v668 = vpop.f32.mrf.mxu0
  %v669 = vadd.f32 %v44, %v668
  %v670 = vpop.f32.mrf.mxu0
  %v671 = vadd.f32 %v44, %v670
  %672 = vdwg.mxu0
  %673 = vmatprep.subr.mxu0 0.0
  %674 = vmatpush1.msra.mxu0 0.0
  %675 = vmatprep.subr.mxu0 0.0
  %676 = vmatpush1.msra.mxu0 0.0
  %677 = vmatprep.subr.mxu0 0.0
  %678 = vmatpush1.msra.mxu0 0.0
  %679 = vmatprep.subr.mxu0 0.0
  %680 = vmatpush1.msra.mxu0 0.0
  %681 = vmatprep.subr.mxu0 0.0
  %682 = vmatpush1.msra.mxu0 0.0
  %683 = vmatprep.subr.mxu0 0.0
  %684 = vmatpush1.msra.mxu0 0.0
  %685 = vmatprep.subr.mxu0 0.0
  %686 = vmatpush1.msra.mxu0 0.0
  %687 = vmatprep.subr.mxu0 0.0
  %688 = vmatpush1.msra.mxu0 0.0
  %689 = vmatprep.subr.mxu0 0.0
  %690 = vmatpush1.msra.mxu0 0.0
  %691 = vmatprep.subr.mxu0 0.0
  %692 = vmatpush1.msra.mxu0 0.0
  %693 = vmatprep.subr.mxu0 0.0
  %694 = vmatpush1.msra.mxu0 0.0
  %695 = vmatprep.subr.mxu0 0.0
  %696 = vmatpush1.msra.mxu0 0.0
  %697 = vmatprep.subr.mxu0 0.0
  %698 = vmatpush1.msra.mxu0 0.0
  %699 = vmatprep.subr.mxu0 0.0
  %700 = vmatpush1.msra.mxu0 0.0
  %701 = vmatprep.subr.mxu0 0.0
  %702 = vmatpush1.msra.mxu0 0.0
  %703 = vmatprep.subr.mxu0 %v598
  %704 = vmatpush1.msra.mxu0 %v597
  %705 = vmatprep.subr.mxu0 0.0
  %706 = vmatpush2.msra.mxu0 0.0
  %707 = vmatprep.subr.mxu0 0.0
  %708 = vmatpush2.msra.mxu0 0.0
  %709 = vmatprep.subr.mxu0 0.0
  %710 = vmatpush2.msra.mxu0 0.0
  %711 = vmatprep.subr.mxu0 0.0
  %712 = vmatpush2.msra.mxu0 0.0
  %713 = vmatprep.subr.mxu0 0.0
  %714 = vmatpush2.msra.mxu0 0.0
  %715 = vmatprep.subr.mxu0 0.0
  %716 = vmatpush2.msra.mxu0 0.0
  %717 = vmatprep.subr.mxu0 0.0
  %718 = vmatpush2.msra.mxu0 0.0
  %719 = vmatprep.subr.mxu0 0.0
  %720 = vmatpush2.msra.mxu0 0.0
  %721 = vmatprep.subr.mxu0 0.0
  %722 = vmatpush2.msra.mxu0 0.0
  %723 = vmatprep.subr.mxu0 0.0
  %724 = vmatpush2.msra.mxu0 0.0
  %725 = vmatprep.subr.mxu0 0.0
  %726 = vmatpush2.msra.mxu0 0.0
  %727 = vmatprep.subr.mxu0 0.0
  %728 = vmatpush2.msra.mxu0 0.0
  %729 = vmatprep.subr.mxu0 0.0
  %730 = vmatpush2.msra.mxu0 0.0
  %731 = vmatprep.subr.mxu0 0.0
  %732 = vmatpush2.msra.mxu0 0.0
  %733 = vmatprep.subr.mxu0 0.0
  %734 = vmatpush2.msra.mxu0 0.0
  %735 = vmatprep.subr.mxu0 0.0
  %736 = vmatpush2.msra.mxu0 0.0
  %737 = vmatprep.mubr.f32.mxu0 0.0
  %738 = vmatmul.mubr.f32.gmra.mxu0 %v600
  %v739 = vpop.f32.mrf.mxu0
  %v740 = vadd.f32 %v44, %v739
  %v741 = vpop.f32.mrf.mxu0
  %v742 = vadd.f32 %v44, %v741
  %743 = vdwg.mxu0
  %v745 = vsel %vm51, %v20, 0
  %747 = vmatprep.subr.mxu0 0.0
  %748 = vmatpush1.msra.mxu0 0.0
  %749 = vmatprep.subr.mxu0 0.0
  %750 = vmatpush1.msra.mxu0 0.0
  %751 = vmatprep.subr.mxu0 0.0
  %752 = vmatpush1.msra.mxu0 0.0
  %753 = vmatprep.subr.mxu0 0.0
  %754 = vmatpush1.msra.mxu0 0.0
  %755 = vmatprep.subr.mxu0 0.0
  %756 = vmatpush1.msra.mxu0 0.0
  %757 = vmatprep.subr.mxu0 0.0
  %758 = vmatpush1.msra.mxu0 0.0
  %759 = vmatprep.subr.mxu0 0.0
  %760 = vmatpush1.msra.mxu0 0.0
  %761 = vmatprep.subr.mxu0 0.0
  %762 = vmatpush1.msra.mxu0 0.0
  %763 = vmatprep.subr.mxu0 0.0
  %764 = vmatpush1.msra.mxu0 0.0
  %765 = vmatprep.subr.mxu0 0.0
  %766 = vmatpush1.msra.mxu0 0.0
  %767 = vmatprep.subr.mxu0 0.0
  %768 = vmatpush1.msra.mxu0 0.0
  %769 = vmatprep.subr.mxu0 0.0
  %770 = vmatpush1.msra.mxu0 0.0
  %771 = vmatprep.subr.mxu0 0.0
  %772 = vmatpush1.msra.mxu0 0.0
  %773 = vmatprep.subr.mxu0 0.0
  %774 = vmatpush1.msra.mxu0 0.0
  %775 = vmatprep.subr.mxu0 0.0
  %776 = vmatpush1.msra.mxu0 0.0
  %777 = vmatprep.subr.mxu0 %v671
  %778 = vmatpush1.msra.mxu0 %v669
  %779 = vmatprep.subr.mxu0 0.0
  %780 = vmatpush2.msra.mxu0 0.0
  %781 = vmatprep.subr.mxu0 0.0
  %782 = vmatpush2.msra.mxu0 0.0
  %783 = vmatprep.subr.mxu0 0.0
  %784 = vmatpush2.msra.mxu0 0.0
  %785 = vmatprep.subr.mxu0 0.0
  %786 = vmatpush2.msra.mxu0 0.0
  %787 = vmatprep.subr.mxu0 0.0
  %788 = vmatpush2.msra.mxu0 0.0
  %789 = vmatprep.subr.mxu0 0.0
  %790 = vmatpush2.msra.mxu0 0.0
  %791 = vmatprep.subr.mxu0 0.0
  %792 = vmatpush2.msra.mxu0 0.0
  %793 = vmatprep.subr.mxu0 0.0
  %794 = vmatpush2.msra.mxu0 0.0
  %795 = vmatprep.subr.mxu0 0.0
  %796 = vmatpush2.msra.mxu0 0.0
  %797 = vmatprep.subr.mxu0 0.0
  %798 = vmatpush2.msra.mxu0 0.0
  %799 = vmatprep.subr.mxu0 0.0
  %800 = vmatpush2.msra.mxu0 0.0
  %801 = vmatprep.subr.mxu0 0.0
  %802 = vmatpush2.msra.mxu0 0.0
  %803 = vmatprep.subr.mxu0 0.0
  %804 = vmatpush2.msra.mxu0 0.0
  %805 = vmatprep.subr.mxu0 0.0
  %806 = vmatpush2.msra.mxu0 0.0
  %807 = vmatprep.subr.mxu0 0.0
  %808 = vmatpush2.msra.mxu0 0.0
  %809 = vmatprep.subr.mxu0 0.0
  %810 = vmatpush2.msra.mxu0 0.0
  %811 = vmatprep.mubr.f32.mxu0 0.0
  %812 = vmatmul.mubr.f32.gmra.mxu0 %v745
  %v813 = vpop.f32.mrf.mxu0
  %v814 = vadd.f32 0.0, %v813
  %v815 = vpop.f32.mrf.mxu0
  %v816 = vadd.f32 0.0, %v815
  %817 = vdwg.mxu0
  %818 = vmatprep.subr.mxu0 0.0
  %819 = vmatpush1.msra.mxu0 0.0
  %820 = vmatprep.subr.mxu0 0.0
  %821 = vmatpush1.msra.mxu0 0.0
  %822 = vmatprep.subr.mxu0 0.0
  %823 = vmatpush1.msra.mxu0 0.0
  %824 = vmatprep.subr.mxu0 0.0
  %825 = vmatpush1.msra.mxu0 0.0
  %826 = vmatprep.subr.mxu0 0.0
  %827 = vmatpush1.msra.mxu0 0.0
  %828 = vmatprep.subr.mxu0 0.0
  %829 = vmatpush1.msra.mxu0 0.0
  %830 = vmatprep.subr.mxu0 0.0
  %831 = vmatpush1.msra.mxu0 0.0
  %832 = vmatprep.subr.mxu0 0.0
  %833 = vmatpush1.msra.mxu0 0.0
  %834 = vmatprep.subr.mxu0 0.0
  %835 = vmatpush1.msra.mxu0 0.0
  %836 = vmatprep.subr.mxu0 0.0
  %837 = vmatpush1.msra.mxu0 0.0
  %838 = vmatprep.subr.mxu0 0.0
  %839 = vmatpush1.msra.mxu0 0.0
  %840 = vmatprep.subr.mxu0 0.0
  %841 = vmatpush1.msra.mxu0 0.0
  %842 = vmatprep.subr.mxu0 0.0
  %843 = vmatpush1.msra.mxu0 0.0
  %844 = vmatprep.subr.mxu0 0.0
  %845 = vmatpush1.msra.mxu0 0.0
  %846 = vmatprep.subr.mxu0 0.0
  %847 = vmatpush1.msra.mxu0 0.0
  %848 = vmatprep.subr.mxu0 %v742
  %849 = vmatpush1.msra.mxu0 %v740
  %850 = vmatprep.subr.mxu0 0.0
  %851 = vmatpush2.msra.mxu0 0.0
  %852 = vmatprep.subr.mxu0 0.0
  %853 = vmatpush2.msra.mxu0 0.0
  %854 = vmatprep.subr.mxu0 0.0
  %855 = vmatpush2.msra.mxu0 0.0
  %856 = vmatprep.subr.mxu0 0.0
  %857 = vmatpush2.msra.mxu0 0.0
  %858 = vmatprep.subr.mxu0 0.0
  %859 = vmatpush2.msra.mxu0 0.0
  %860 = vmatprep.subr.mxu0 0.0
  %861 = vmatpush2.msra.mxu0 0.0
  %862 = vmatprep.subr.mxu0 0.0
  %863 = vmatpush2.msra.mxu0 0.0
  %864 = vmatprep.subr.mxu0 0.0
  %865 = vmatpush2.msra.mxu0 0.0
  %866 = vmatprep.subr.mxu0 0.0
  %867 = vmatpush2.msra.mxu0 0.0
  %868 = vmatprep.subr.mxu0 0.0
  %869 = vmatpush2.msra.mxu0 0.0
  %870 = vmatprep.subr.mxu0 0.0
  %871 = vmatpush2.msra.mxu0 0.0
  %872 = vmatprep.subr.mxu0 0.0
  %873 = vmatpush2.msra.mxu0 0.0
  %874 = vmatprep.subr.mxu0 0.0
  %875 = vmatpush2.msra.mxu0 0.0
  %876 = vmatprep.subr.mxu0 0.0
  %877 = vmatpush2.msra.mxu0 0.0
  %878 = vmatprep.subr.mxu0 0.0
  %879 = vmatpush2.msra.mxu0 0.0
  %880 = vmatprep.subr.mxu0 0.0
  %881 = vmatpush2.msra.mxu0 0.0
  %882 = vmatprep.mubr.f32.mxu0 0.0
  %883 = vmatmul.mubr.f32.gmra.mxu0 %v745
  %v884 = vpop.f32.mrf.mxu0
  %v885 = vadd.f32 0.0, %v884
  %v886 = vpop.f32.mrf.mxu0
  %v887 = vadd.f32 0.0, %v886
  %888 = vdwg.mxu0
  %v890 = vsel %vm51, %v26, 0
  %892 = vmatprep.subr.mxu0 0.0
  %893 = vmatpush1.msra.mxu0 0.0
  %894 = vmatprep.subr.mxu0 0.0
  %895 = vmatpush1.msra.mxu0 0.0
  %896 = vmatprep.subr.mxu0 0.0
  %897 = vmatpush1.msra.mxu0 0.0
  %898 = vmatprep.subr.mxu0 0.0
  %899 = vmatpush1.msra.mxu0 0.0
  %900 = vmatprep.subr.mxu0 0.0
  %901 = vmatpush1.msra.mxu0 0.0
  %902 = vmatprep.subr.mxu0 0.0
  %903 = vmatpush1.msra.mxu0 0.0
  %904 = vmatprep.subr.mxu0 0.0
  %905 = vmatpush1.msra.mxu0 0.0
  %906 = vmatprep.subr.mxu0 0.0
  %907 = vmatpush1.msra.mxu0 0.0
  %908 = vmatprep.subr.mxu0 0.0
  %909 = vmatpush1.msra.mxu0 0.0
  %910 = vmatprep.subr.mxu0 0.0
  %911 = vmatpush1.msra.mxu0 0.0
  %912 = vmatprep.subr.mxu0 0.0
  %913 = vmatpush1.msra.mxu0 0.0
  %914 = vmatprep.subr.mxu0 0.0
  %915 = vmatpush1.msra.mxu0 0.0
  %916 = vmatprep.subr.mxu0 0.0
  %917 = vmatpush1.msra.mxu0 0.0
  %918 = vmatprep.subr.mxu0 0.0
  %919 = vmatpush1.msra.mxu0 0.0
  %920 = vmatprep.subr.mxu0 0.0
  %921 = vmatpush1.msra.mxu0 0.0
  %922 = vmatprep.subr.mxu0 %v671
  %923 = vmatpush1.msra.mxu0 %v669
  %924 = vmatprep.subr.mxu0 0.0
  %925 = vmatpush2.msra.mxu0 0.0
  %926 = vmatprep.subr.mxu0 0.0
  %927 = vmatpush2.msra.mxu0 0.0
  %928 = vmatprep.subr.mxu0 0.0
  %929 = vmatpush2.msra.mxu0 0.0
  %930 = vmatprep.subr.mxu0 0.0
  %931 = vmatpush2.msra.mxu0 0.0
  %932 = vmatprep.subr.mxu0 0.0
  %933 = vmatpush2.msra.mxu0 0.0
  %934 = vmatprep.subr.mxu0 0.0
  %935 = vmatpush2.msra.mxu0 0.0
  %936 = vmatprep.subr.mxu0 0.0
  %937 = vmatpush2.msra.mxu0 0.0
  %938 = vmatprep.subr.mxu0 0.0
  %939 = vmatpush2.msra.mxu0 0.0
  %940 = vmatprep.subr.mxu0 0.0
  %941 = vmatpush2.msra.mxu0 0.0
  %942 = vmatprep.subr.mxu0 0.0
  %943 = vmatpush2.msra.mxu0 0.0
  %944 = vmatprep.subr.mxu0 0.0
  %945 = vmatpush2.msra.mxu0 0.0
  %946 = vmatprep.subr.mxu0 0.0
  %947 = vmatpush2.msra.mxu0 0.0
  %948 = vmatprep.subr.mxu0 0.0
  %949 = vmatpush2.msra.mxu0 0.0
  %950 = vmatprep.subr.mxu0 0.0
  %951 = vmatpush2.msra.mxu0 0.0
  %952 = vmatprep.subr.mxu0 0.0
  %953 = vmatpush2.msra.mxu0 0.0
  %954 = vmatprep.subr.mxu0 0.0
  %955 = vmatpush2.msra.mxu0 0.0
  %956 = vmatprep.mubr.f32.mxu0 0.0
  %957 = vmatmul.mubr.f32.gmra.mxu0 %v890
  %v958 = vpop.f32.mrf.mxu0
  %v959 = vadd.f32 0.0, %v958
  %v960 = vpop.f32.mrf.mxu0
  %v961 = vadd.f32 0.0, %v960
  %962 = vdwg.mxu0
  %963 = vmatprep.subr.mxu0 0.0
  %964 = vmatpush1.msra.mxu0 0.0
  %965 = vmatprep.subr.mxu0 0.0
  %966 = vmatpush1.msra.mxu0 0.0
  %967 = vmatprep.subr.mxu0 0.0
  %968 = vmatpush1.msra.mxu0 0.0
  %969 = vmatprep.subr.mxu0 0.0
  %970 = vmatpush1.msra.mxu0 0.0
  %971 = vmatprep.subr.mxu0 0.0
  %972 = vmatpush1.msra.mxu0 0.0
  %973 = vmatprep.subr.mxu0 0.0
  %974 = vmatpush1.msra.mxu0 0.0
  %975 = vmatprep.subr.mxu0 0.0
  %976 = vmatpush1.msra.mxu0 0.0
  %977 = vmatprep.subr.mxu0 0.0
  %978 = vmatpush1.msra.mxu0 0.0
  %979 = vmatprep.subr.mxu0 0.0
  %980 = vmatpush1.msra.mxu0 0.0
  %981 = vmatprep.subr.mxu0 0.0
  %982 = vmatpush1.msra.mxu0 0.0
  %983 = vmatprep.subr.mxu0 0.0
  %984 = vmatpush1.msra.mxu0 0.0
  %985 = vmatprep.subr.mxu0 0.0
  %986 = vmatpush1.msra.mxu0 0.0
  %987 = vmatprep.subr.mxu0 0.0
  %988 = vmatpush1.msra.mxu0 0.0
  %989 = vmatprep.subr.mxu0 0.0
  %990 = vmatpush1.msra.mxu0 0.0
  %991 = vmatprep.subr.mxu0 0.0
  %992 = vmatpush1.msra.mxu0 0.0
  %993 = vmatprep.subr.mxu0 %v742
  %994 = vmatpush1.msra.mxu0 %v740
  %995 = vmatprep.subr.mxu0 0.0
  %996 = vmatpush2.msra.mxu0 0.0
  %997 = vmatprep.subr.mxu0 0.0
  %998 = vmatpush2.msra.mxu0 0.0
  %999 = vmatprep.subr.mxu0 0.0
  %1000 = vmatpush2.msra.mxu0 0.0
  %1001 = vmatprep.subr.mxu0 0.0
  %1002 = vmatpush2.msra.mxu0 0.0
  %1003 = vmatprep.subr.mxu0 0.0
  %1004 = vmatpush2.msra.mxu0 0.0
  %1005 = vmatprep.subr.mxu0 0.0
  %1006 = vmatpush2.msra.mxu0 0.0
  %1007 = vmatprep.subr.mxu0 0.0
  %1008 = vmatpush2.msra.mxu0 0.0
  %1009 = vmatprep.subr.mxu0 0.0
  %1010 = vmatpush2.msra.mxu0 0.0
  %1011 = vmatprep.subr.mxu0 0.0
  %1012 = vmatpush2.msra.mxu0 0.0
  %1013 = vmatprep.subr.mxu0 0.0
  %1014 = vmatpush2.msra.mxu0 0.0
  %1015 = vmatprep.subr.mxu0 0.0
  %1016 = vmatpush2.msra.mxu0 0.0
  %1017 = vmatprep.subr.mxu0 0.0
  %1018 = vmatpush2.msra.mxu0 0.0
  %1019 = vmatprep.subr.mxu0 0.0
  %1020 = vmatpush2.msra.mxu0 0.0
  %1021 = vmatprep.subr.mxu0 0.0
  %1022 = vmatpush2.msra.mxu0 0.0
  %1023 = vmatprep.subr.mxu0 0.0
  %1024 = vmatpush2.msra.mxu0 0.0
  %1025 = vmatprep.subr.mxu0 0.0
  %1026 = vmatpush2.msra.mxu0 0.0
  %1027 = vmatprep.mubr.f32.mxu0 0.0
  %1028 = vmatmul.mubr.f32.gmra.mxu0 %v890
  %v1029 = vpop.f32.mrf.mxu0
  %v1030 = vadd.f32 0.0, %v1029
  %v1031 = vpop.f32.mrf.mxu0
  %v1032 = vadd.f32 0.0, %v1031
  %1033 = vdwg.mxu0
  %v1035 = vsel %vm51, %v28, 0
  %1037 = vmatprep.subr.mxu0 0.0
  %1038 = vmatpush1.msra.mxu0 0.0
  %1039 = vmatprep.subr.mxu0 0.0
  %1040 = vmatpush1.msra.mxu0 0.0
  %1041 = vmatprep.subr.mxu0 0.0
  %1042 = vmatpush1.msra.mxu0 0.0
  %1043 = vmatprep.subr.mxu0 0.0
  %1044 = vmatpush1.msra.mxu0 0.0
  %1045 = vmatprep.subr.mxu0 0.0
  %1046 = vmatpush1.msra.mxu0 0.0
  %1047 = vmatprep.subr.mxu0 0.0
  %1048 = vmatpush1.msra.mxu0 0.0
  %1049 = vmatprep.subr.mxu0 0.0
  %1050 = vmatpush1.msra.mxu0 0.0
  %1051 = vmatprep.subr.mxu0 0.0
  %1052 = vmatpush1.msra.mxu0 0.0
  %1053 = vmatprep.subr.mxu0 0.0
  %1054 = vmatpush1.msra.mxu0 0.0
  %1055 = vmatprep.subr.mxu0 0.0
  %1056 = vmatpush1.msra.mxu0 0.0
  %1057 = vmatprep.subr.mxu0 0.0
  %1058 = vmatpush1.msra.mxu0 0.0
  %1059 = vmatprep.subr.mxu0 0.0
  %1060 = vmatpush1.msra.mxu0 0.0
  %1061 = vmatprep.subr.mxu0 0.0
  %1062 = vmatpush1.msra.mxu0 0.0
  %1063 = vmatprep.subr.mxu0 0.0
  %1064 = vmatpush1.msra.mxu0 0.0
  %1065 = vmatprep.subr.mxu0 0.0
  %1066 = vmatpush1.msra.mxu0 0.0
  %1067 = vmatprep.subr.mxu0 %v671
  %1068 = vmatpush1.msra.mxu0 %v669
  %1069 = vmatprep.subr.mxu0 0.0
  %1070 = vmatpush2.msra.mxu0 0.0
  %1071 = vmatprep.subr.mxu0 0.0
  %1072 = vmatpush2.msra.mxu0 0.0
  %1073 = vmatprep.subr.mxu0 0.0
  %1074 = vmatpush2.msra.mxu0 0.0
  %1075 = vmatprep.subr.mxu0 0.0
  %1076 = vmatpush2.msra.mxu0 0.0
  %1077 = vmatprep.subr.mxu0 0.0
  %1078 = vmatpush2.msra.mxu0 0.0
  %1079 = vmatprep.subr.mxu0 0.0
  %1080 = vmatpush2.msra.mxu0 0.0
  %1081 = vmatprep.subr.mxu0 0.0
  %1082 = vmatpush2.msra.mxu0 0.0
  %1083 = vmatprep.subr.mxu0 0.0
  %1084 = vmatpush2.msra.mxu0 0.0
  %1085 = vmatprep.subr.mxu0 0.0
  %1086 = vmatpush2.msra.mxu0 0.0
  %1087 = vmatprep.subr.mxu0 0.0
  %1088 = vmatpush2.msra.mxu0 0.0
  %1089 = vmatprep.subr.mxu0 0.0
  %1090 = vmatpush2.msra.mxu0 0.0
  %1091 = vmatprep.subr.mxu0 0.0
  %1092 = vmatpush2.msra.mxu0 0.0
  %1093 = vmatprep.subr.mxu0 0.0
  %1094 = vmatpush2.msra.mxu0 0.0
  %1095 = vmatprep.subr.mxu0 0.0
  %1096 = vmatpush2.msra.mxu0 0.0
  %1097 = vmatprep.subr.mxu0 0.0
  %1098 = vmatpush2.msra.mxu0 0.0
  %1099 = vmatprep.subr.mxu0 0.0
  %1100 = vmatpush2.msra.mxu0 0.0
  %1101 = vmatprep.mubr.f32.mxu0 0.0
  %1102 = vmatmul.mubr.f32.gmra.mxu0 %v1035
  %v1103 = vpop.f32.mrf.mxu0
  %v1104 = vadd.f32 0.0, %v1103
  %v1105 = vpop.f32.mrf.mxu0
  %v1106 = vadd.f32 0.0, %v1105
  %1107 = vdwg.mxu0
  %1108 = vmatprep.subr.mxu0 0.0
  %1109 = vmatpush1.msra.mxu0 0.0
  %1110 = vmatprep.subr.mxu0 0.0
  %1111 = vmatpush1.msra.mxu0 0.0
  %1112 = vmatprep.subr.mxu0 0.0
  %1113 = vmatpush1.msra.mxu0 0.0
  %1114 = vmatprep.subr.mxu0 0.0
  %1115 = vmatpush1.msra.mxu0 0.0
  %1116 = vmatprep.subr.mxu0 0.0
  %1117 = vmatpush1.msra.mxu0 0.0
  %1118 = vmatprep.subr.mxu0 0.0
  %1119 = vmatpush1.msra.mxu0 0.0
  %1120 = vmatprep.subr.mxu0 0.0
  %1121 = vmatpush1.msra.mxu0 0.0
  %1122 = vmatprep.subr.mxu0 0.0
  %1123 = vmatpush1.msra.mxu0 0.0
  %1124 = vmatprep.subr.mxu0 0.0
  %1125 = vmatpush1.msra.mxu0 0.0
  %1126 = vmatprep.subr.mxu0 0.0
  %1127 = vmatpush1.msra.mxu0 0.0
  %1128 = vmatprep.subr.mxu0 0.0
  %1129 = vmatpush1.msra.mxu0 0.0
  %1130 = vmatprep.subr.mxu0 0.0
  %1131 = vmatpush1.msra.mxu0 0.0
  %1132 = vmatprep.subr.mxu0 0.0
  %1133 = vmatpush1.msra.mxu0 0.0
  %1134 = vmatprep.subr.mxu0 0.0
  %1135 = vmatpush1.msra.mxu0 0.0
  %1136 = vmatprep.subr.mxu0 0.0
  %1137 = vmatpush1.msra.mxu0 0.0
  %1138 = vmatprep.subr.mxu0 %v742
  %1139 = vmatpush1.msra.mxu0 %v740
  %1140 = vmatprep.subr.mxu0 0.0
  %1141 = vmatpush2.msra.mxu0 0.0
  %1142 = vmatprep.subr.mxu0 0.0
  %1143 = vmatpush2.msra.mxu0 0.0
  %1144 = vmatprep.subr.mxu0 0.0
  %1145 = vmatpush2.msra.mxu0 0.0
  %1146 = vmatprep.subr.mxu0 0.0
  %1147 = vmatpush2.msra.mxu0 0.0
  %1148 = vmatprep.subr.mxu0 0.0
  %1149 = vmatpush2.msra.mxu0 0.0
  %1150 = vmatprep.subr.mxu0 0.0
  %1151 = vmatpush2.msra.mxu0 0.0
  %1152 = vmatprep.subr.mxu0 0.0
  %1153 = vmatpush2.msra.mxu0 0.0
  %1154 = vmatprep.subr.mxu0 0.0
  %1155 = vmatpush2.msra.mxu0 0.0
  %1156 = vmatprep.subr.mxu0 0.0
  %1157 = vmatpush2.msra.mxu0 0.0
  %1158 = vmatprep.subr.mxu0 0.0
  %1159 = vmatpush2.msra.mxu0 0.0
  %1160 = vmatprep.subr.mxu0 0.0
  %1161 = vmatpush2.msra.mxu0 0.0
  %1162 = vmatprep.subr.mxu0 0.0
  %1163 = vmatpush2.msra.mxu0 0.0
  %1164 = vmatprep.subr.mxu0 0.0
  %1165 = vmatpush2.msra.mxu0 0.0
  %1166 = vmatprep.subr.mxu0 0.0
  %1167 = vmatpush2.msra.mxu0 0.0
  %1168 = vmatprep.subr.mxu0 0.0
  %1169 = vmatpush2.msra.mxu0 0.0
  %1170 = vmatprep.subr.mxu0 0.0
  %1171 = vmatpush2.msra.mxu0 0.0
  %1172 = vmatprep.mubr.f32.mxu0 0.0
  %1173 = vmatmul.mubr.f32.gmra.mxu0 %v1035
  %v1174 = vpop.f32.mrf.mxu0
  %v1175 = vadd.f32 0.0, %v1174
  %v1176 = vpop.f32.mrf.mxu0
  %v1177 = vadd.f32 0.0, %v1176
  %1178 = vdwg.mxu0
  %v1179 = vsub.f32 %v16, %v814
  %v1180 = vsub.f32 %v17, %v816
  %v1181 = vsub.f32 %v18, %v885
  %v1182 = vsub.f32 %v19, %v887
  %v1183 = vsub.f32 %v122, %v959
  %v1184 = vsub.f32 %v124, %v961
  %v1185 = vsub.f32 %v193, %v1030
  %v1186 = vsub.f32 %v195, %v1032
  %v1187 = vsub.f32 %v267, %v1104
  %v1188 = vsub.f32 %v269, %v1106
  %v1189 = vsub.f32 %v338, %v1175
  %v1190 = vsub.f32 %v340, %v1177
  %v1191 = vmul.f32 %v1179, %v1187
  %v1192 = vmul.f32 %v1180, %v1188
  %v1193 = vmul.f32 %v1181, %v1189
  %v1194 = vmul.f32 %v1182, %v1190
  %v1195 = vmul.f32 %v1187, %v1187
  %v1196 = vmul.f32 %v1188, %v1188
  %v1197 = vmul.f32 %v1189, %v1189
  %v1198 = vmul.f32 %v1190, %v1190
  %v1199 = vadd.f32 %v1191, %v1192
  %1200 = vadd.xlane.f32.xlu0 %v1199
  %v1201 = vpop.xlane.xlu0 %1200
  %v1202 = vrot.slane %v1201, 4
  %v1203 = vadd.f32 %v1201, %v1202
  %v1204 = vrot.slane %v1203, 2
  %v1205 = vadd.f32 %v1203, %v1204
  %v1206 = vrot.slane %v1205, 1
  %v1207 = vadd.f32 %v1205, %v1206
  %s1208 = vtos %v1207
  %v1209 = vadd.f32 %v1195, %v1196
  %1210 = vadd.xlane.f32.xlu0 %v1209
  %v1211 = vpop.xlane.xlu0 %1210
  %v1212 = vrot.slane %v1211, 4
  %v1213 = vadd.f32 %v1211, %v1212
  %v1214 = vrot.slane %v1213, 2
  %v1215 = vadd.f32 %v1213, %v1214
  %v1216 = vrot.slane %v1215, 1
  %v1217 = vadd.f32 %v1215, %v1216
  %s1218 = vtos %v1217
  %v1219 = vstv %s1208
  %v1220 = vsel %vm378, %v1219, 0.0
  %v1221 = vsel %vm379, %v1219, 0.0
  %v1222 = vsel %vm380, %v1219, 0.0
  %v1223 = vsel %vm381, %v1219, 0.0
  %v1224 = vstv %s1218
  %v1225 = vsel %vm378, %v1224, 0.0
  %v1226 = vsel %vm379, %v1224, 0.0
  %v1227 = vsel %vm380, %v1224, 0.0
  %v1228 = vsel %vm381, %v1224, 0.0
  %v1229 = vadd.f32 %v1193, %v1194
  %1230 = vadd.xlane.f32.xlu0 %v1229
  %v1231 = vpop.xlane.xlu0 %1230
  %v1232 = vrot.slane %v1231, 4
  %v1233 = vadd.f32 %v1231, %v1232
  %v1234 = vrot.slane %v1233, 2
  %v1235 = vadd.f32 %v1233, %v1234
  %v1236 = vrot.slane %v1235, 1
  %v1237 = vadd.f32 %v1235, %v1236
  %s1238 = vtos %v1237
  %v1239 = vadd.f32 %v1197, %v1198
  %1240 = vadd.xlane.f32.xlu0 %v1239
  %v1241 = vpop.xlane.xlu0 %1240
  %v1242 = vrot.slane %v1241, 4
  %v1243 = vadd.f32 %v1241, %v1242
  %v1244 = vrot.slane %v1243, 2
  %v1245 = vadd.f32 %v1243, %v1244
  %v1246 = vrot.slane %v1245, 1
  %v1247 = vadd.f32 %v1245, %v1246
  %s1248 = vtos %v1247
  %v1249 = vstv %s1238
  %v1250 = vsel %vm420, %v1249, %v1220
  %v1251 = vsel %vm421, %v1249, %v1221
  %v1252 = vsel %vm422, %v1249, %v1222
  %v1253 = vsel %vm423, %v1249, %v1223
  %v1254 = vstv %s1248
  %v1255 = vsel %vm420, %v1254, %v1225
  %v1256 = vsel %vm421, %v1254, %v1226
  %v1257 = vsel %vm422, %v1254, %v1227
  %v1258 = vsel %vm423, %v1254, %v1228
  %v1259 = vadd.f32 %v1255, 1e-20
  %v1260 = vadd.f32 %v1256, 1e-20
  %v1261 = vadd.f32 %v1257, 1e-20
  %v1262 = vadd.f32 %v1258, 1e-20
  %v1263 = vrcp.pop %v1259
  %v1264 = vrcp.pop %v1260
  %v1265 = vrcp.pop %v1261
  %v1266 = vrcp.pop %v1262
  %v1267 = vmul.f32 %v1250, %v1263
  %v1268 = vmul.f32 %v1251, %v1264
  %v1269 = vmul.f32 %v1252, %v1265
  %v1270 = vmul.f32 %v1253, %v1266
  %v1271 = vmul.f32 %v1267, %v1183
  %v1272 = vmul.f32 %v1268, %v1184
  %v1273 = vmul.f32 %v1269, %v1185
  %v1274 = vmul.f32 %v1270, %v1186
  %v1275 = vadd.f32 %v669, %v1271
  %v1276 = vadd.f32 %v671, %v1272
  %v1277 = vadd.f32 %v740, %v1273
  %v1278 = vadd.f32 %v742, %v1274
  %1279 = vmatprep.subr.mxu0 0.0
  %1280 = vmatpush1.msra.mxu0 0.0
  %1281 = vmatprep.subr.mxu0 0.0
  %1282 = vmatpush1.msra.mxu0 0.0
  %1283 = vmatprep.subr.mxu0 0.0
  %1284 = vmatpush1.msra.mxu0 0.0
  %1285 = vmatprep.subr.mxu0 0.0
  %1286 = vmatpush1.msra.mxu0 0.0
  %1287 = vmatprep.subr.mxu0 0.0
  %1288 = vmatpush1.msra.mxu0 0.0
  %1289 = vmatprep.subr.mxu0 0.0
  %1290 = vmatpush1.msra.mxu0 0.0
  %1291 = vmatprep.subr.mxu0 0.0
  %1292 = vmatpush1.msra.mxu0 0.0
  %1293 = vmatprep.subr.mxu0 0.0
  %1294 = vmatpush1.msra.mxu0 0.0
  %1295 = vmatprep.subr.mxu0 0.0
  %1296 = vmatpush1.msra.mxu0 0.0
  %1297 = vmatprep.subr.mxu0 0.0
  %1298 = vmatpush1.msra.mxu0 0.0
  %1299 = vmatprep.subr.mxu0 0.0
  %1300 = vmatpush1.msra.mxu0 0.0
  %1301 = vmatprep.subr.mxu0 0.0
  %1302 = vmatpush1.msra.mxu0 0.0
  %1303 = vmatprep.subr.mxu0 0.0
  %1304 = vmatpush1.msra.mxu0 0.0
  %1305 = vmatprep.subr.mxu0 0.0
  %1306 = vmatpush1.msra.mxu0 0.0
  %1307 = vmatprep.subr.mxu0 0.0
  %1308 = vmatpush1.msra.mxu0 0.0
  %1309 = vmatprep.subr.mxu0 %v1276
  %1310 = vmatpush1.msra.mxu0 %v1275
  %1311 = vmatprep.subr.mxu0 0.0
  %1312 = vmatpush2.msra.mxu0 0.0
  %1313 = vmatprep.subr.mxu0 0.0
  %1314 = vmatpush2.msra.mxu0 0.0
  %1315 = vmatprep.subr.mxu0 0.0
  %1316 = vmatpush2.msra.mxu0 0.0
  %1317 = vmatprep.subr.mxu0 0.0
  %1318 = vmatpush2.msra.mxu0 0.0
  %1319 = vmatprep.subr.mxu0 0.0
  %1320 = vmatpush2.msra.mxu0 0.0
  %1321 = vmatprep.subr.mxu0 0.0
  %1322 = vmatpush2.msra.mxu0 0.0
  %1323 = vmatprep.subr.mxu0 0.0
  %1324 = vmatpush2.msra.mxu0 0.0
  %1325 = vmatprep.subr.mxu0 0.0
  %1326 = vmatpush2.msra.mxu0 0.0
  %1327 = vmatprep.subr.mxu0 0.0
  %1328 = vmatpush2.msra.mxu0 0.0
  %1329 = vmatprep.subr.mxu0 0.0
  %1330 = vmatpush2.msra.mxu0 0.0
  %1331 = vmatprep.subr.mxu0 0.0
  %1332 = vmatpush2.msra.mxu0 0.0
  %1333 = vmatprep.subr.mxu0 0.0
  %1334 = vmatpush2.msra.mxu0 0.0
  %1335 = vmatprep.subr.mxu0 0.0
  %1336 = vmatpush2.msra.mxu0 0.0
  %1337 = vmatprep.subr.mxu0 0.0
  %1338 = vmatpush2.msra.mxu0 0.0
  %1339 = vmatprep.subr.mxu0 0.0
  %1340 = vmatpush2.msra.mxu0 0.0
  %1341 = vmatprep.subr.mxu0 0.0
  %1342 = vmatpush2.msra.mxu0 0.0
  %1343 = vmatprep.mubr.f32.mxu0 0.0
  %1344 = vmatmul.mubr.f32.gmra.mxu0 %v451
  %v1345 = vpop.f32.mrf.mxu0
  %v1346 = vadd.f32 %v37, %v1345
  %v1347 = vpop.f32.mrf.mxu0
  %v1348 = vadd.f32 %v37, %v1347
  %1349 = vdwg.mxu0
  %1350 = vmatprep.subr.mxu0 0.0
  %1351 = vmatpush1.msra.mxu0 0.0
  %1352 = vmatprep.subr.mxu0 0.0
  %1353 = vmatpush1.msra.mxu0 0.0
  %1354 = vmatprep.subr.mxu0 0.0
  %1355 = vmatpush1.msra.mxu0 0.0
  %1356 = vmatprep.subr.mxu0 0.0
  %1357 = vmatpush1.msra.mxu0 0.0
  %1358 = vmatprep.subr.mxu0 0.0
  %1359 = vmatpush1.msra.mxu0 0.0
  %1360 = vmatprep.subr.mxu0 0.0
  %1361 = vmatpush1.msra.mxu0 0.0
  %1362 = vmatprep.subr.mxu0 0.0
  %1363 = vmatpush1.msra.mxu0 0.0
  %1364 = vmatprep.subr.mxu0 0.0
  %1365 = vmatpush1.msra.mxu0 0.0
  %1366 = vmatprep.subr.mxu0 0.0
  %1367 = vmatpush1.msra.mxu0 0.0
  %1368 = vmatprep.subr.mxu0 0.0
  %1369 = vmatpush1.msra.mxu0 0.0
  %1370 = vmatprep.subr.mxu0 0.0
  %1371 = vmatpush1.msra.mxu0 0.0
  %1372 = vmatprep.subr.mxu0 0.0
  %1373 = vmatpush1.msra.mxu0 0.0
  %1374 = vmatprep.subr.mxu0 0.0
  %1375 = vmatpush1.msra.mxu0 0.0
  %1376 = vmatprep.subr.mxu0 0.0
  %1377 = vmatpush1.msra.mxu0 0.0
  %1378 = vmatprep.subr.mxu0 0.0
  %1379 = vmatpush1.msra.mxu0 0.0
  %1380 = vmatprep.subr.mxu0 %v1278
  %1381 = vmatpush1.msra.mxu0 %v1277
  %1382 = vmatprep.subr.mxu0 0.0
  %1383 = vmatpush2.msra.mxu0 0.0
  %1384 = vmatprep.subr.mxu0 0.0
  %1385 = vmatpush2.msra.mxu0 0.0
  %1386 = vmatprep.subr.mxu0 0.0
  %1387 = vmatpush2.msra.mxu0 0.0
  %1388 = vmatprep.subr.mxu0 0.0
  %1389 = vmatpush2.msra.mxu0 0.0
  %1390 = vmatprep.subr.mxu0 0.0
  %1391 = vmatpush2.msra.mxu0 0.0
  %1392 = vmatprep.subr.mxu0 0.0
  %1393 = vmatpush2.msra.mxu0 0.0
  %1394 = vmatprep.subr.mxu0 0.0
  %1395 = vmatpush2.msra.mxu0 0.0
  %1396 = vmatprep.subr.mxu0 0.0
  %1397 = vmatpush2.msra.mxu0 0.0
  %1398 = vmatprep.subr.mxu0 0.0
  %1399 = vmatpush2.msra.mxu0 0.0
  %1400 = vmatprep.subr.mxu0 0.0
  %1401 = vmatpush2.msra.mxu0 0.0
  %1402 = vmatprep.subr.mxu0 0.0
  %1403 = vmatpush2.msra.mxu0 0.0
  %1404 = vmatprep.subr.mxu0 0.0
  %1405 = vmatpush2.msra.mxu0 0.0
  %1406 = vmatprep.subr.mxu0 0.0
  %1407 = vmatpush2.msra.mxu0 0.0
  %1408 = vmatprep.subr.mxu0 0.0
  %1409 = vmatpush2.msra.mxu0 0.0
  %1410 = vmatprep.subr.mxu0 0.0
  %1411 = vmatpush2.msra.mxu0 0.0
  %1412 = vmatprep.subr.mxu0 0.0
  %1413 = vmatpush2.msra.mxu0 0.0
  %1414 = vmatprep.mubr.f32.mxu0 0.0
  %1415 = vmatmul.mubr.f32.gmra.mxu0 %v451
  %v1416 = vpop.f32.mrf.mxu0
  %v1417 = vadd.f32 %v37, %v1416
  %v1418 = vpop.f32.mrf.mxu0
  %v1419 = vadd.f32 %v37, %v1418
  %1420 = vdwg.mxu0
  %v1421 = vtanh.pop %v1346
  %v1422 = vtanh.pop %v1348
  %v1423 = vtanh.pop %v1417
  %v1424 = vtanh.pop %v1419
  %1425 = vmatprep.subr.mxu0 0.0
  %1426 = vmatpush1.msra.mxu0 0.0
  %1427 = vmatprep.subr.mxu0 0.0
  %1428 = vmatpush1.msra.mxu0 0.0
  %1429 = vmatprep.subr.mxu0 0.0
  %1430 = vmatpush1.msra.mxu0 0.0
  %1431 = vmatprep.subr.mxu0 0.0
  %1432 = vmatpush1.msra.mxu0 0.0
  %1433 = vmatprep.subr.mxu0 0.0
  %1434 = vmatpush1.msra.mxu0 0.0
  %1435 = vmatprep.subr.mxu0 0.0
  %1436 = vmatpush1.msra.mxu0 0.0
  %1437 = vmatprep.subr.mxu0 0.0
  %1438 = vmatpush1.msra.mxu0 0.0
  %1439 = vmatprep.subr.mxu0 0.0
  %1440 = vmatpush1.msra.mxu0 0.0
  %1441 = vmatprep.subr.mxu0 0.0
  %1442 = vmatpush1.msra.mxu0 0.0
  %1443 = vmatprep.subr.mxu0 0.0
  %1444 = vmatpush1.msra.mxu0 0.0
  %1445 = vmatprep.subr.mxu0 0.0
  %1446 = vmatpush1.msra.mxu0 0.0
  %1447 = vmatprep.subr.mxu0 0.0
  %1448 = vmatpush1.msra.mxu0 0.0
  %1449 = vmatprep.subr.mxu0 0.0
  %1450 = vmatpush1.msra.mxu0 0.0
  %1451 = vmatprep.subr.mxu0 0.0
  %1452 = vmatpush1.msra.mxu0 0.0
  %1453 = vmatprep.subr.mxu0 0.0
  %1454 = vmatpush1.msra.mxu0 0.0
  %1455 = vmatprep.subr.mxu0 %v1422
  %1456 = vmatpush1.msra.mxu0 %v1421
  %1457 = vmatprep.subr.mxu0 0.0
  %1458 = vmatpush2.msra.mxu0 0.0
  %1459 = vmatprep.subr.mxu0 0.0
  %1460 = vmatpush2.msra.mxu0 0.0
  %1461 = vmatprep.subr.mxu0 0.0
  %1462 = vmatpush2.msra.mxu0 0.0
  %1463 = vmatprep.subr.mxu0 0.0
  %1464 = vmatpush2.msra.mxu0 0.0
  %1465 = vmatprep.subr.mxu0 0.0
  %1466 = vmatpush2.msra.mxu0 0.0
  %1467 = vmatprep.subr.mxu0 0.0
  %1468 = vmatpush2.msra.mxu0 0.0
  %1469 = vmatprep.subr.mxu0 0.0
  %1470 = vmatpush2.msra.mxu0 0.0
  %1471 = vmatprep.subr.mxu0 0.0
  %1472 = vmatpush2.msra.mxu0 0.0
  %1473 = vmatprep.subr.mxu0 0.0
  %1474 = vmatpush2.msra.mxu0 0.0
  %1475 = vmatprep.subr.mxu0 0.0
  %1476 = vmatpush2.msra.mxu0 0.0
  %1477 = vmatprep.subr.mxu0 0.0
  %1478 = vmatpush2.msra.mxu0 0.0
  %1479 = vmatprep.subr.mxu0 0.0
  %1480 = vmatpush2.msra.mxu0 0.0
  %1481 = vmatprep.subr.mxu0 0.0
  %1482 = vmatpush2.msra.mxu0 0.0
  %1483 = vmatprep.subr.mxu0 0.0
  %1484 = vmatpush2.msra.mxu0 0.0
  %1485 = vmatprep.subr.mxu0 0.0
  %1486 = vmatpush2.msra.mxu0 0.0
  %1487 = vmatprep.subr.mxu0 0.0
  %1488 = vmatpush2.msra.mxu0 0.0
  %1489 = vmatprep.mubr.f32.mxu0 0.0
  %1490 = vmatmul.mubr.f32.gmra.mxu0 %v600
  %v1491 = vpop.f32.mrf.mxu0
  %v1492 = vadd.f32 %v44, %v1491
  %v1493 = vpop.f32.mrf.mxu0
  %v1494 = vadd.f32 %v44, %v1493
  %1495 = vdwg.mxu0
  %1496 = vmatprep.subr.mxu0 0.0
  %1497 = vmatpush1.msra.mxu0 0.0
  %1498 = vmatprep.subr.mxu0 0.0
  %1499 = vmatpush1.msra.mxu0 0.0
  %1500 = vmatprep.subr.mxu0 0.0
  %1501 = vmatpush1.msra.mxu0 0.0
  %1502 = vmatprep.subr.mxu0 0.0
  %1503 = vmatpush1.msra.mxu0 0.0
  %1504 = vmatprep.subr.mxu0 0.0
  %1505 = vmatpush1.msra.mxu0 0.0
  %1506 = vmatprep.subr.mxu0 0.0
  %1507 = vmatpush1.msra.mxu0 0.0
  %1508 = vmatprep.subr.mxu0 0.0
  %1509 = vmatpush1.msra.mxu0 0.0
  %1510 = vmatprep.subr.mxu0 0.0
  %1511 = vmatpush1.msra.mxu0 0.0
  %1512 = vmatprep.subr.mxu0 0.0
  %1513 = vmatpush1.msra.mxu0 0.0
  %1514 = vmatprep.subr.mxu0 0.0
  %1515 = vmatpush1.msra.mxu0 0.0
  %1516 = vmatprep.subr.mxu0 0.0
  %1517 = vmatpush1.msra.mxu0 0.0
  %1518 = vmatprep.subr.mxu0 0.0
  %1519 = vmatpush1.msra.mxu0 0.0
  %1520 = vmatprep.subr.mxu0 0.0
  %1521 = vmatpush1.msra.mxu0 0.0
  %1522 = vmatprep.subr.mxu0 0.0
  %1523 = vmatpush1.msra.mxu0 0.0
  %1524 = vmatprep.subr.mxu0 0.0
  %1525 = vmatpush1.msra.mxu0 0.0
  %1526 = vmatprep.subr.mxu0 %v1424
  %1527 = vmatpush1.msra.mxu0 %v1423
  %1528 = vmatprep.subr.mxu0 0.0
  %1529 = vmatpush2.msra.mxu0 0.0
  %1530 = vmatprep.subr.mxu0 0.0
  %1531 = vmatpush2.msra.mxu0 0.0
  %1532 = vmatprep.subr.mxu0 0.0
  %1533 = vmatpush2.msra.mxu0 0.0
  %1534 = vmatprep.subr.mxu0 0.0
  %1535 = vmatpush2.msra.mxu0 0.0
  %1536 = vmatprep.subr.mxu0 0.0
  %1537 = vmatpush2.msra.mxu0 0.0
  %1538 = vmatprep.subr.mxu0 0.0
  %1539 = vmatpush2.msra.mxu0 0.0
  %1540 = vmatprep.subr.mxu0 0.0
  %1541 = vmatpush2.msra.mxu0 0.0
  %1542 = vmatprep.subr.mxu0 0.0
  %1543 = vmatpush2.msra.mxu0 0.0
  %1544 = vmatprep.subr.mxu0 0.0
  %1545 = vmatpush2.msra.mxu0 0.0
  %1546 = vmatprep.subr.mxu0 0.0
  %1547 = vmatpush2.msra.mxu0 0.0
  %1548 = vmatprep.subr.mxu0 0.0
  %1549 = vmatpush2.msra.mxu0 0.0
  %1550 = vmatprep.subr.mxu0 0.0
  %1551 = vmatpush2.msra.mxu0 0.0
  %1552 = vmatprep.subr.mxu0 0.0
  %1553 = vmatpush2.msra.mxu0 0.0
  %1554 = vmatprep.subr.mxu0 0.0
  %1555 = vmatpush2.msra.mxu0 0.0
  %1556 = vmatprep.subr.mxu0 0.0
  %1557 = vmatpush2.msra.mxu0 0.0
  %1558 = vmatprep.subr.mxu0 0.0
  %1559 = vmatpush2.msra.mxu0 0.0
  %1560 = vmatprep.mubr.f32.mxu0 0.0
  %1561 = vmatmul.mubr.f32.gmra.mxu0 %v600
  %v1562 = vpop.f32.mrf.mxu0
  %v1563 = vadd.f32 %v44, %v1562
  %v1564 = vpop.f32.mrf.mxu0
  %v1565 = vadd.f32 %v44, %v1564
  %1566 = vdwg.mxu0
  %1567 = vmatprep.subr.mxu0 0.0
  %1568 = vmatpush1.msra.mxu0 0.0
  %1569 = vmatprep.subr.mxu0 0.0
  %1570 = vmatpush1.msra.mxu0 0.0
  %1571 = vmatprep.subr.mxu0 0.0
  %1572 = vmatpush1.msra.mxu0 0.0
  %1573 = vmatprep.subr.mxu0 0.0
  %1574 = vmatpush1.msra.mxu0 0.0
  %1575 = vmatprep.subr.mxu0 0.0
  %1576 = vmatpush1.msra.mxu0 0.0
  %1577 = vmatprep.subr.mxu0 0.0
  %1578 = vmatpush1.msra.mxu0 0.0
  %1579 = vmatprep.subr.mxu0 0.0
  %1580 = vmatpush1.msra.mxu0 0.0
  %1581 = vmatprep.subr.mxu0 0.0
  %1582 = vmatpush1.msra.mxu0 0.0
  %1583 = vmatprep.subr.mxu0 0.0
  %1584 = vmatpush1.msra.mxu0 0.0
  %1585 = vmatprep.subr.mxu0 0.0
  %1586 = vmatpush1.msra.mxu0 0.0
  %1587 = vmatprep.subr.mxu0 0.0
  %1588 = vmatpush1.msra.mxu0 0.0
  %1589 = vmatprep.subr.mxu0 0.0
  %1590 = vmatpush1.msra.mxu0 0.0
  %1591 = vmatprep.subr.mxu0 0.0
  %1592 = vmatpush1.msra.mxu0 0.0
  %1593 = vmatprep.subr.mxu0 0.0
  %1594 = vmatpush1.msra.mxu0 0.0
  %1595 = vmatprep.subr.mxu0 0.0
  %1596 = vmatpush1.msra.mxu0 0.0
  %1597 = vmatprep.subr.mxu0 %v1494
  %1598 = vmatpush1.msra.mxu0 %v1492
  %1599 = vmatprep.subr.mxu0 0.0
  %1600 = vmatpush2.msra.mxu0 0.0
  %1601 = vmatprep.subr.mxu0 0.0
  %1602 = vmatpush2.msra.mxu0 0.0
  %1603 = vmatprep.subr.mxu0 0.0
  %1604 = vmatpush2.msra.mxu0 0.0
  %1605 = vmatprep.subr.mxu0 0.0
  %1606 = vmatpush2.msra.mxu0 0.0
  %1607 = vmatprep.subr.mxu0 0.0
  %1608 = vmatpush2.msra.mxu0 0.0
  %1609 = vmatprep.subr.mxu0 0.0
  %1610 = vmatpush2.msra.mxu0 0.0
  %1611 = vmatprep.subr.mxu0 0.0
  %1612 = vmatpush2.msra.mxu0 0.0
  %1613 = vmatprep.subr.mxu0 0.0
  %1614 = vmatpush2.msra.mxu0 0.0
  %1615 = vmatprep.subr.mxu0 0.0
  %1616 = vmatpush2.msra.mxu0 0.0
  %1617 = vmatprep.subr.mxu0 0.0
  %1618 = vmatpush2.msra.mxu0 0.0
  %1619 = vmatprep.subr.mxu0 0.0
  %1620 = vmatpush2.msra.mxu0 0.0
  %1621 = vmatprep.subr.mxu0 0.0
  %1622 = vmatpush2.msra.mxu0 0.0
  %1623 = vmatprep.subr.mxu0 0.0
  %1624 = vmatpush2.msra.mxu0 0.0
  %1625 = vmatprep.subr.mxu0 0.0
  %1626 = vmatpush2.msra.mxu0 0.0
  %1627 = vmatprep.subr.mxu0 0.0
  %1628 = vmatpush2.msra.mxu0 0.0
  %1629 = vmatprep.subr.mxu0 0.0
  %1630 = vmatpush2.msra.mxu0 0.0
  %1631 = vmatprep.mubr.f32.mxu0 0.0
  %1632 = vmatmul.mubr.f32.gmra.mxu0 %v745
  %v1633 = vpop.f32.mrf.mxu0
  %v1634 = vadd.f32 0.0, %v1633
  %v1635 = vpop.f32.mrf.mxu0
  %v1636 = vadd.f32 0.0, %v1635
  %1637 = vdwg.mxu0
  %1638 = vmatprep.subr.mxu0 0.0
  %1639 = vmatpush1.msra.mxu0 0.0
  %1640 = vmatprep.subr.mxu0 0.0
  %1641 = vmatpush1.msra.mxu0 0.0
  %1642 = vmatprep.subr.mxu0 0.0
  %1643 = vmatpush1.msra.mxu0 0.0
  %1644 = vmatprep.subr.mxu0 0.0
  %1645 = vmatpush1.msra.mxu0 0.0
  %1646 = vmatprep.subr.mxu0 0.0
  %1647 = vmatpush1.msra.mxu0 0.0
  %1648 = vmatprep.subr.mxu0 0.0
  %1649 = vmatpush1.msra.mxu0 0.0
  %1650 = vmatprep.subr.mxu0 0.0
  %1651 = vmatpush1.msra.mxu0 0.0
  %1652 = vmatprep.subr.mxu0 0.0
  %1653 = vmatpush1.msra.mxu0 0.0
  %1654 = vmatprep.subr.mxu0 0.0
  %1655 = vmatpush1.msra.mxu0 0.0
  %1656 = vmatprep.subr.mxu0 0.0
  %1657 = vmatpush1.msra.mxu0 0.0
  %1658 = vmatprep.subr.mxu0 0.0
  %1659 = vmatpush1.msra.mxu0 0.0
  %1660 = vmatprep.subr.mxu0 0.0
  %1661 = vmatpush1.msra.mxu0 0.0
  %1662 = vmatprep.subr.mxu0 0.0
  %1663 = vmatpush1.msra.mxu0 0.0
  %1664 = vmatprep.subr.mxu0 0.0
  %1665 = vmatpush1.msra.mxu0 0.0
  %1666 = vmatprep.subr.mxu0 0.0
  %1667 = vmatpush1.msra.mxu0 0.0
  %1668 = vmatprep.subr.mxu0 %v1565
  %1669 = vmatpush1.msra.mxu0 %v1563
  %1670 = vmatprep.subr.mxu0 0.0
  %1671 = vmatpush2.msra.mxu0 0.0
  %1672 = vmatprep.subr.mxu0 0.0
  %1673 = vmatpush2.msra.mxu0 0.0
  %1674 = vmatprep.subr.mxu0 0.0
  %1675 = vmatpush2.msra.mxu0 0.0
  %1676 = vmatprep.subr.mxu0 0.0
  %1677 = vmatpush2.msra.mxu0 0.0
  %1678 = vmatprep.subr.mxu0 0.0
  %1679 = vmatpush2.msra.mxu0 0.0
  %1680 = vmatprep.subr.mxu0 0.0
  %1681 = vmatpush2.msra.mxu0 0.0
  %1682 = vmatprep.subr.mxu0 0.0
  %1683 = vmatpush2.msra.mxu0 0.0
  %1684 = vmatprep.subr.mxu0 0.0
  %1685 = vmatpush2.msra.mxu0 0.0
  %1686 = vmatprep.subr.mxu0 0.0
  %1687 = vmatpush2.msra.mxu0 0.0
  %1688 = vmatprep.subr.mxu0 0.0
  %1689 = vmatpush2.msra.mxu0 0.0
  %1690 = vmatprep.subr.mxu0 0.0
  %1691 = vmatpush2.msra.mxu0 0.0
  %1692 = vmatprep.subr.mxu0 0.0
  %1693 = vmatpush2.msra.mxu0 0.0
  %1694 = vmatprep.subr.mxu0 0.0
  %1695 = vmatpush2.msra.mxu0 0.0
  %1696 = vmatprep.subr.mxu0 0.0
  %1697 = vmatpush2.msra.mxu0 0.0
  %1698 = vmatprep.subr.mxu0 0.0
  %1699 = vmatpush2.msra.mxu0 0.0
  %1700 = vmatprep.subr.mxu0 0.0
  %1701 = vmatpush2.msra.mxu0 0.0
  %1702 = vmatprep.mubr.f32.mxu0 0.0
  %1703 = vmatmul.mubr.f32.gmra.mxu0 %v745
  %v1704 = vpop.f32.mrf.mxu0
  %v1705 = vadd.f32 0.0, %v1704
  %v1706 = vpop.f32.mrf.mxu0
  %v1707 = vadd.f32 0.0, %v1706
  %1708 = vdwg.mxu0
  %1709 = vmatprep.subr.mxu0 0.0
  %1710 = vmatpush1.msra.mxu0 0.0
  %1711 = vmatprep.subr.mxu0 0.0
  %1712 = vmatpush1.msra.mxu0 0.0
  %1713 = vmatprep.subr.mxu0 0.0
  %1714 = vmatpush1.msra.mxu0 0.0
  %1715 = vmatprep.subr.mxu0 0.0
  %1716 = vmatpush1.msra.mxu0 0.0
  %1717 = vmatprep.subr.mxu0 0.0
  %1718 = vmatpush1.msra.mxu0 0.0
  %1719 = vmatprep.subr.mxu0 0.0
  %1720 = vmatpush1.msra.mxu0 0.0
  %1721 = vmatprep.subr.mxu0 0.0
  %1722 = vmatpush1.msra.mxu0 0.0
  %1723 = vmatprep.subr.mxu0 0.0
  %1724 = vmatpush1.msra.mxu0 0.0
  %1725 = vmatprep.subr.mxu0 0.0
  %1726 = vmatpush1.msra.mxu0 0.0
  %1727 = vmatprep.subr.mxu0 0.0
  %1728 = vmatpush1.msra.mxu0 0.0
  %1729 = vmatprep.subr.mxu0 0.0
  %1730 = vmatpush1.msra.mxu0 0.0
  %1731 = vmatprep.subr.mxu0 0.0
  %1732 = vmatpush1.msra.mxu0 0.0
  %1733 = vmatprep.subr.mxu0 0.0
  %1734 = vmatpush1.msra.mxu0 0.0
  %1735 = vmatprep.subr.mxu0 0.0
  %1736 = vmatpush1.msra.mxu0 0.0
  %1737 = vmatprep.subr.mxu0 0.0
  %1738 = vmatpush1.msra.mxu0 0.0
  %1739 = vmatprep.subr.mxu0 %v1494
  %1740 = vmatpush1.msra.mxu0 %v1492
  %1741 = vmatprep.subr.mxu0 0.0
  %1742 = vmatpush2.msra.mxu0 0.0
  %1743 = vmatprep.subr.mxu0 0.0
  %1744 = vmatpush2.msra.mxu0 0.0
  %1745 = vmatprep.subr.mxu0 0.0
  %1746 = vmatpush2.msra.mxu0 0.0
  %1747 = vmatprep.subr.mxu0 0.0
  %1748 = vmatpush2.msra.mxu0 0.0
  %1749 = vmatprep.subr.mxu0 0.0
  %1750 = vmatpush2.msra.mxu0 0.0
  %1751 = vmatprep.subr.mxu0 0.0
  %1752 = vmatpush2.msra.mxu0 0.0
  %1753 = vmatprep.subr.mxu0 0.0
  %1754 = vmatpush2.msra.mxu0 0.0
  %1755 = vmatprep.subr.mxu0 0.0
  %1756 = vmatpush2.msra.mxu0 0.0
  %1757 = vmatprep.subr.mxu0 0.0
  %1758 = vmatpush2.msra.mxu0 0.0
  %1759 = vmatprep.subr.mxu0 0.0
  %1760 = vmatpush2.msra.mxu0 0.0
  %1761 = vmatprep.subr.mxu0 0.0
  %1762 = vmatpush2.msra.mxu0 0.0
  %1763 = vmatprep.subr.mxu0 0.0
  %1764 = vmatpush2.msra.mxu0 0.0
  %1765 = vmatprep.subr.mxu0 0.0
  %1766 = vmatpush2.msra.mxu0 0.0
  %1767 = vmatprep.subr.mxu0 0.0
  %1768 = vmatpush2.msra.mxu0 0.0
  %1769 = vmatprep.subr.mxu0 0.0
  %1770 = vmatpush2.msra.mxu0 0.0
  %1771 = vmatprep.subr.mxu0 0.0
  %1772 = vmatpush2.msra.mxu0 0.0
  %1773 = vmatprep.mubr.f32.mxu0 0.0
  %1774 = vmatmul.mubr.f32.gmra.mxu0 %v890
  %v1775 = vpop.f32.mrf.mxu0
  %v1776 = vadd.f32 0.0, %v1775
  %v1777 = vpop.f32.mrf.mxu0
  %v1778 = vadd.f32 0.0, %v1777
  %1779 = vdwg.mxu0
  %1780 = vmatprep.subr.mxu0 0.0
  %1781 = vmatpush1.msra.mxu0 0.0
  %1782 = vmatprep.subr.mxu0 0.0
  %1783 = vmatpush1.msra.mxu0 0.0
  %1784 = vmatprep.subr.mxu0 0.0
  %1785 = vmatpush1.msra.mxu0 0.0
  %1786 = vmatprep.subr.mxu0 0.0
  %1787 = vmatpush1.msra.mxu0 0.0
  %1788 = vmatprep.subr.mxu0 0.0
  %1789 = vmatpush1.msra.mxu0 0.0
  %1790 = vmatprep.subr.mxu0 0.0
  %1791 = vmatpush1.msra.mxu0 0.0
  %1792 = vmatprep.subr.mxu0 0.0
  %1793 = vmatpush1.msra.mxu0 0.0
  %1794 = vmatprep.subr.mxu0 0.0
  %1795 = vmatpush1.msra.mxu0 0.0
  %1796 = vmatprep.subr.mxu0 0.0
  %1797 = vmatpush1.msra.mxu0 0.0
  %1798 = vmatprep.subr.mxu0 0.0
  %1799 = vmatpush1.msra.mxu0 0.0
  %1800 = vmatprep.subr.mxu0 0.0
  %1801 = vmatpush1.msra.mxu0 0.0
  %1802 = vmatprep.subr.mxu0 0.0
  %1803 = vmatpush1.msra.mxu0 0.0
  %1804 = vmatprep.subr.mxu0 0.0
  %1805 = vmatpush1.msra.mxu0 0.0
  %1806 = vmatprep.subr.mxu0 0.0
  %1807 = vmatpush1.msra.mxu0 0.0
  %1808 = vmatprep.subr.mxu0 0.0
  %1809 = vmatpush1.msra.mxu0 0.0
  %1810 = vmatprep.subr.mxu0 %v1565
  %1811 = vmatpush1.msra.mxu0 %v1563
  %1812 = vmatprep.subr.mxu0 0.0
  %1813 = vmatpush2.msra.mxu0 0.0
  %1814 = vmatprep.subr.mxu0 0.0
  %1815 = vmatpush2.msra.mxu0 0.0
  %1816 = vmatprep.subr.mxu0 0.0
  %1817 = vmatpush2.msra.mxu0 0.0
  %1818 = vmatprep.subr.mxu0 0.0
  %1819 = vmatpush2.msra.mxu0 0.0
  %1820 = vmatprep.subr.mxu0 0.0
  %1821 = vmatpush2.msra.mxu0 0.0
  %1822 = vmatprep.subr.mxu0 0.0
  %1823 = vmatpush2.msra.mxu0 0.0
  %1824 = vmatprep.subr.mxu0 0.0
  %1825 = vmatpush2.msra.mxu0 0.0
  %1826 = vmatprep.subr.mxu0 0.0
  %1827 = vmatpush2.msra.mxu0 0.0
  %1828 = vmatprep.subr.mxu0 0.0
  %1829 = vmatpush2.msra.mxu0 0.0
  %1830 = vmatprep.subr.mxu0 0.0
  %1831 = vmatpush2.msra.mxu0 0.0
  %1832 = vmatprep.subr.mxu0 0.0
  %1833 = vmatpush2.msra.mxu0 0.0
  %1834 = vmatprep.subr.mxu0 0.0
  %1835 = vmatpush2.msra.mxu0 0.0
  %1836 = vmatprep.subr.mxu0 0.0
  %1837 = vmatpush2.msra.mxu0 0.0
  %1838 = vmatprep.subr.mxu0 0.0
  %1839 = vmatpush2.msra.mxu0 0.0
  %1840 = vmatprep.subr.mxu0 0.0
  %1841 = vmatpush2.msra.mxu0 0.0
  %1842 = vmatprep.subr.mxu0 0.0
  %1843 = vmatpush2.msra.mxu0 0.0
  %1844 = vmatprep.mubr.f32.mxu0 0.0
  %1845 = vmatmul.mubr.f32.gmra.mxu0 %v890
  %v1846 = vpop.f32.mrf.mxu0
  %v1847 = vadd.f32 0.0, %v1846
  %v1848 = vpop.f32.mrf.mxu0
  %v1849 = vadd.f32 0.0, %v1848
  %1850 = vdwg.mxu0
  %1851 = vmatprep.subr.mxu0 0.0
  %1852 = vmatpush1.msra.mxu0 0.0
  %1853 = vmatprep.subr.mxu0 0.0
  %1854 = vmatpush1.msra.mxu0 0.0
  %1855 = vmatprep.subr.mxu0 0.0
  %1856 = vmatpush1.msra.mxu0 0.0
  %1857 = vmatprep.subr.mxu0 0.0
  %1858 = vmatpush1.msra.mxu0 0.0
  %1859 = vmatprep.subr.mxu0 0.0
  %1860 = vmatpush1.msra.mxu0 0.0
  %1861 = vmatprep.subr.mxu0 0.0
  %1862 = vmatpush1.msra.mxu0 0.0
  %1863 = vmatprep.subr.mxu0 0.0
  %1864 = vmatpush1.msra.mxu0 0.0
  %1865 = vmatprep.subr.mxu0 0.0
  %1866 = vmatpush1.msra.mxu0 0.0
  %1867 = vmatprep.subr.mxu0 0.0
  %1868 = vmatpush1.msra.mxu0 0.0
  %1869 = vmatprep.subr.mxu0 0.0
  %1870 = vmatpush1.msra.mxu0 0.0
  %1871 = vmatprep.subr.mxu0 0.0
  %1872 = vmatpush1.msra.mxu0 0.0
  %1873 = vmatprep.subr.mxu0 0.0
  %1874 = vmatpush1.msra.mxu0 0.0
  %1875 = vmatprep.subr.mxu0 0.0
  %1876 = vmatpush1.msra.mxu0 0.0
  %1877 = vmatprep.subr.mxu0 0.0
  %1878 = vmatpush1.msra.mxu0 0.0
  %1879 = vmatprep.subr.mxu0 0.0
  %1880 = vmatpush1.msra.mxu0 0.0
  %1881 = vmatprep.subr.mxu0 %v1494
  %1882 = vmatpush1.msra.mxu0 %v1492
  %1883 = vmatprep.subr.mxu0 0.0
  %1884 = vmatpush2.msra.mxu0 0.0
  %1885 = vmatprep.subr.mxu0 0.0
  %1886 = vmatpush2.msra.mxu0 0.0
  %1887 = vmatprep.subr.mxu0 0.0
  %1888 = vmatpush2.msra.mxu0 0.0
  %1889 = vmatprep.subr.mxu0 0.0
  %1890 = vmatpush2.msra.mxu0 0.0
  %1891 = vmatprep.subr.mxu0 0.0
  %1892 = vmatpush2.msra.mxu0 0.0
  %1893 = vmatprep.subr.mxu0 0.0
  %1894 = vmatpush2.msra.mxu0 0.0
  %1895 = vmatprep.subr.mxu0 0.0
  %1896 = vmatpush2.msra.mxu0 0.0
  %1897 = vmatprep.subr.mxu0 0.0
  %1898 = vmatpush2.msra.mxu0 0.0
  %1899 = vmatprep.subr.mxu0 0.0
  %1900 = vmatpush2.msra.mxu0 0.0
  %1901 = vmatprep.subr.mxu0 0.0
  %1902 = vmatpush2.msra.mxu0 0.0
  %1903 = vmatprep.subr.mxu0 0.0
  %1904 = vmatpush2.msra.mxu0 0.0
  %1905 = vmatprep.subr.mxu0 0.0
  %1906 = vmatpush2.msra.mxu0 0.0
  %1907 = vmatprep.subr.mxu0 0.0
  %1908 = vmatpush2.msra.mxu0 0.0
  %1909 = vmatprep.subr.mxu0 0.0
  %1910 = vmatpush2.msra.mxu0 0.0
  %1911 = vmatprep.subr.mxu0 0.0
  %1912 = vmatpush2.msra.mxu0 0.0
  %1913 = vmatprep.subr.mxu0 0.0
  %1914 = vmatpush2.msra.mxu0 0.0
  %1915 = vmatprep.mubr.f32.mxu0 0.0
  %1916 = vmatmul.mubr.f32.gmra.mxu0 %v1035
  %v1917 = vpop.f32.mrf.mxu0
  %v1918 = vadd.f32 0.0, %v1917
  %v1919 = vpop.f32.mrf.mxu0
  %v1920 = vadd.f32 0.0, %v1919
  %1921 = vdwg.mxu0
  %1922 = vmatprep.subr.mxu0 0.0
  %1923 = vmatpush1.msra.mxu0 0.0
  %1924 = vmatprep.subr.mxu0 0.0
  %1925 = vmatpush1.msra.mxu0 0.0
  %1926 = vmatprep.subr.mxu0 0.0
  %1927 = vmatpush1.msra.mxu0 0.0
  %1928 = vmatprep.subr.mxu0 0.0
  %1929 = vmatpush1.msra.mxu0 0.0
  %1930 = vmatprep.subr.mxu0 0.0
  %1931 = vmatpush1.msra.mxu0 0.0
  %1932 = vmatprep.subr.mxu0 0.0
  %1933 = vmatpush1.msra.mxu0 0.0
  %1934 = vmatprep.subr.mxu0 0.0
  %1935 = vmatpush1.msra.mxu0 0.0
  %1936 = vmatprep.subr.mxu0 0.0
  %1937 = vmatpush1.msra.mxu0 0.0
  %1938 = vmatprep.subr.mxu0 0.0
  %1939 = vmatpush1.msra.mxu0 0.0
  %1940 = vmatprep.subr.mxu0 0.0
  %1941 = vmatpush1.msra.mxu0 0.0
  %1942 = vmatprep.subr.mxu0 0.0
  %1943 = vmatpush1.msra.mxu0 0.0
  %1944 = vmatprep.subr.mxu0 0.0
  %1945 = vmatpush1.msra.mxu0 0.0
  %1946 = vmatprep.subr.mxu0 0.0
  %1947 = vmatpush1.msra.mxu0 0.0
  %1948 = vmatprep.subr.mxu0 0.0
  %1949 = vmatpush1.msra.mxu0 0.0
  %1950 = vmatprep.subr.mxu0 0.0
  %1951 = vmatpush1.msra.mxu0 0.0
  %1952 = vmatprep.subr.mxu0 %v1565
  %1953 = vmatpush1.msra.mxu0 %v1563
  %1954 = vmatprep.subr.mxu0 0.0
  %1955 = vmatpush2.msra.mxu0 0.0
  %1956 = vmatprep.subr.mxu0 0.0
  %1957 = vmatpush2.msra.mxu0 0.0
  %1958 = vmatprep.subr.mxu0 0.0
  %1959 = vmatpush2.msra.mxu0 0.0
  %1960 = vmatprep.subr.mxu0 0.0
  %1961 = vmatpush2.msra.mxu0 0.0
  %1962 = vmatprep.subr.mxu0 0.0
  %1963 = vmatpush2.msra.mxu0 0.0
  %1964 = vmatprep.subr.mxu0 0.0
  %1965 = vmatpush2.msra.mxu0 0.0
  %1966 = vmatprep.subr.mxu0 0.0
  %1967 = vmatpush2.msra.mxu0 0.0
  %1968 = vmatprep.subr.mxu0 0.0
  %1969 = vmatpush2.msra.mxu0 0.0
  %1970 = vmatprep.subr.mxu0 0.0
  %1971 = vmatpush2.msra.mxu0 0.0
  %1972 = vmatprep.subr.mxu0 0.0
  %1973 = vmatpush2.msra.mxu0 0.0
  %1974 = vmatprep.subr.mxu0 0.0
  %1975 = vmatpush2.msra.mxu0 0.0
  %1976 = vmatprep.subr.mxu0 0.0
  %1977 = vmatpush2.msra.mxu0 0.0
  %1978 = vmatprep.subr.mxu0 0.0
  %1979 = vmatpush2.msra.mxu0 0.0
  %1980 = vmatprep.subr.mxu0 0.0
  %1981 = vmatpush2.msra.mxu0 0.0
  %1982 = vmatprep.subr.mxu0 0.0
  %1983 = vmatpush2.msra.mxu0 0.0
  %1984 = vmatprep.subr.mxu0 0.0
  %1985 = vmatpush2.msra.mxu0 0.0
  %1986 = vmatprep.mubr.f32.mxu0 0.0
  %1987 = vmatmul.mubr.f32.gmra.mxu0 %v1035
  %v1988 = vpop.f32.mrf.mxu0
  %v1989 = vadd.f32 0.0, %v1988
  %v1990 = vpop.f32.mrf.mxu0
  %v1991 = vadd.f32 0.0, %v1990
  %1992 = vdwg.mxu0
  %v1993 = vsub.f32 %v16, %v1634
  %v1994 = vsub.f32 %v17, %v1636
  %v1995 = vsub.f32 %v18, %v1705
  %v1996 = vsub.f32 %v19, %v1707
  %v1997 = vsub.f32 %v122, %v1776
  %v1998 = vsub.f32 %v124, %v1778
  %v1999 = vsub.f32 %v193, %v1847
  %v2000 = vsub.f32 %v195, %v1849
  %v2001 = vsub.f32 %v267, %v1918
  %v2002 = vsub.f32 %v269, %v1920
  %v2003 = vsub.f32 %v338, %v1989
  %v2004 = vsub.f32 %v340, %v1991
  %v2005 = vmul.f32 %v1993, %v2001
  %v2006 = vmul.f32 %v1994, %v2002
  %v2007 = vmul.f32 %v1995, %v2003
  %v2008 = vmul.f32 %v1996, %v2004
  %v2009 = vmul.f32 %v2001, %v2001
  %v2010 = vmul.f32 %v2002, %v2002
  %v2011 = vmul.f32 %v2003, %v2003
  %v2012 = vmul.f32 %v2004, %v2004
  %v2013 = vadd.f32 %v2005, %v2006
  %2014 = vadd.xlane.f32.xlu0 %v2013
  %v2015 = vpop.xlane.xlu0 %2014
  %v2016 = vrot.slane %v2015, 4
  %v2017 = vadd.f32 %v2015, %v2016
  %v2018 = vrot.slane %v2017, 2
  %v2019 = vadd.f32 %v2017, %v2018
  %v2020 = vrot.slane %v2019, 1
  %v2021 = vadd.f32 %v2019, %v2020
  %s2022 = vtos %v2021
  %v2023 = vadd.f32 %v2009, %v2010
  %2024 = vadd.xlane.f32.xlu0 %v2023
  %v2025 = vpop.xlane.xlu0 %2024
  %v2026 = vrot.slane %v2025, 4
  %v2027 = vadd.f32 %v2025, %v2026
  %v2028 = vrot.slane %v2027, 2
  %v2029 = vadd.f32 %v2027, %v2028
  %v2030 = vrot.slane %v2029, 1
  %v2031 = vadd.f32 %v2029, %v2030
  %s2032 = vtos %v2031
  %v2033 = vstv %s2022
  %v2034 = vsel %vm378, %v2033, 0.0
  %v2035 = vsel %vm379, %v2033, 0.0
  %v2036 = vsel %vm380, %v2033, 0.0
  %v2037 = vsel %vm381, %v2033, 0.0
  %v2038 = vstv %s2032
  %v2039 = vsel %vm378, %v2038, 0.0
  %v2040 = vsel %vm379, %v2038, 0.0
  %v2041 = vsel %vm380, %v2038, 0.0
  %v2042 = vsel %vm381, %v2038, 0.0
  %v2043 = vadd.f32 %v2007, %v2008
  %2044 = vadd.xlane.f32.xlu0 %v2043
  %v2045 = vpop.xlane.xlu0 %2044
  %v2046 = vrot.slane %v2045, 4
  %v2047 = vadd.f32 %v2045, %v2046
  %v2048 = vrot.slane %v2047, 2
  %v2049 = vadd.f32 %v2047, %v2048
  %v2050 = vrot.slane %v2049, 1
  %v2051 = vadd.f32 %v2049, %v2050
  %s2052 = vtos %v2051
  %v2053 = vadd.f32 %v2011, %v2012
  %2054 = vadd.xlane.f32.xlu0 %v2053
  %v2055 = vpop.xlane.xlu0 %2054
  %v2056 = vrot.slane %v2055, 4
  %v2057 = vadd.f32 %v2055, %v2056
  %v2058 = vrot.slane %v2057, 2
  %v2059 = vadd.f32 %v2057, %v2058
  %v2060 = vrot.slane %v2059, 1
  %v2061 = vadd.f32 %v2059, %v2060
  %s2062 = vtos %v2061
  %v2063 = vstv %s2052
  %v2064 = vsel %vm420, %v2063, %v2034
  %v2065 = vsel %vm421, %v2063, %v2035
  %v2066 = vsel %vm422, %v2063, %v2036
  %v2067 = vsel %vm423, %v2063, %v2037
  %v2068 = vstv %s2062
  %v2069 = vsel %vm420, %v2068, %v2039
  %v2070 = vsel %vm421, %v2068, %v2040
  %v2071 = vsel %vm422, %v2068, %v2041
  %v2072 = vsel %vm423, %v2068, %v2042
  %v2073 = vadd.f32 %v2069, 1e-20
  %v2074 = vadd.f32 %v2070, 1e-20
  %v2075 = vadd.f32 %v2071, 1e-20
  %v2076 = vadd.f32 %v2072, 1e-20
  %v2077 = vrcp.pop %v2073
  %v2078 = vrcp.pop %v2074
  %v2079 = vrcp.pop %v2075
  %v2080 = vrcp.pop %v2076
  %v2081 = vmul.f32 %v2064, %v2077
  %v2082 = vmul.f32 %v2065, %v2078
  %v2083 = vmul.f32 %v2066, %v2079
  %v2084 = vmul.f32 %v2067, %v2080
  %v2085 = vmul.f32 %v2081, %v1997
  %v2086 = vmul.f32 %v2082, %v1998
  %v2087 = vmul.f32 %v2083, %v1999
  %v2088 = vmul.f32 %v2084, %v2000
  %v2089 = vadd.f32 %v1492, %v2085
  %v2090 = vadd.f32 %v1494, %v2086
  %v2091 = vadd.f32 %v1563, %v2087
  %v2092 = vadd.f32 %v1565, %v2088
  %2093 = vst [vmem:[%s3] sm:$0xff] %v2089
  %2094 = vst [vmem:[%s3 + $0x8] sm:$0xff] %v2090
  %2095 = vst [vmem:[%s3 + $0x10] sm:$0xff] %v2091
  %2096 = vst [vmem:[%s3 + $0x18] sm:$0xff] %v2092
  %2097 = vst [vmem:[%s4] sm:$0xff] %v1492
  %2098 = vst [vmem:[%s4 + $0x8] sm:$0xff] %v1494
  %2099 = vst [vmem:[%s4 + $0x10] sm:$0xff] %v1563
  %2100 = vst [vmem:[%s4 + $0x18] sm:$0xff] %v1565
  // Predicated region
  $region14: #{neural_proximal_gradient_forward.1} parent=0 // pred_check
    _
  $region15: #{neural_proximal_gradient_forward.1} parent=0 // pred_check_branch
    %2102 = sbr.rel (0) target = $region17
  $region16: #{neural_proximal_gradient_forward.1} parent=0 // pred_region
    _
  $region17: #{neural_proximal_gradient_forward.1} parent=0 // pred_fallthru
    _
  // Predicated region
  $region18: #{neural_proximal_gradient_forward.1} parent=0 // pred_check
    _
  $region19: #{neural_proximal_gradient_forward.1} parent=0 // pred_check_branch
    %2104 = sbr.rel (0) target = $region21
  $region20: #{neural_proximal_gradient_forward.1} parent=0 // pred_region
    _
  $region21: #{neural_proximal_gradient_forward.1} parent=0 // pred_fallthru
    _
  // Predicated region
  $region22: #{neural_proximal_gradient_forward.1} parent=0 // pred_check
    _
  $region23: #{neural_proximal_gradient_forward.1} parent=0 // pred_check_branch
    %2106 = sbr.rel (0) target = $region25
  $region24: #{neural_proximal_gradient_forward.1} parent=0 // pred_region
    _
  $region25: #{neural_proximal_gradient_forward.1} parent=0 // pred_fallthru
    _
  // Predicated region
  $region26: #{neural_proximal_gradient_forward.1} parent=0 // pred_check
    _
  $region27: #{neural_proximal_gradient_forward.1} parent=0 // pred_check_branch
    %2108 = sbr.rel (0) target = $region29
  $region28: #{neural_proximal_gradient_forward.1} parent=0 // pred_region
    _
  $region29: #{neural_proximal_gradient_forward.1} parent=0 // pred_fallthru
    _

</llo_original>
